<compile_context>
chip_gen: v6e
topology: v6e:2x2x1
jax: 0.10.0
libtpu: 0.0.40
codegen_flags: <defaults>
</compile_context>

<pallas_src>
import math
import functools

import jax
import jax.numpy as jnp
import numpy as np
from jax.experimental import pallas as pl
from jax.experimental.pallas import tpu as pltpu


def _layernorm_f32(z, gamma, beta, eps=1e-5):
    # z: (T, D) float32; gamma/beta: (1, D)
    mu = jnp.mean(z, axis=-1, keepdims=True)
    var = jnp.mean((z - mu) ** 2, axis=-1, keepdims=True)
    return (z - mu) * jax.lax.rsqrt(var + eps) * gamma + beta


def encoder_layer_kernel(
    x_ref, mask_ref,
    wqkv_ref, bqkv_ref,           # (D, 3D) act-dtype, (1, 3D) f32 (Q cols pre-scaled)
    wo_ref, bo_ref,               # (D, D), (1, D)
    g1_ref, be1_ref,
    w1_ref, b1_ref, w2_ref, b2_ref,
    g2_ref, be2_ref,
    out_ref,
    q_all, k_all, v_all,          # VMEM scratch (S, D) in act dtype (carried over q)
    heads_scr,                    # VMEM scratch (TQ, D) in act dtype
    *, n_heads: int, q_tile: int,
):
    D = x_ref.shape[-1]
    d_k = D // n_heads
    cdt = x_ref.dtype             # MXU operand dtype (bf16 fast path if caller uses bf16)
    q_idx = pl.program_id(1)

    # ---- Fused Q/K/V projection of the FULL sequence, once per batch element.
    # Reused for every query tile of this batch element (q axis is "arbitrary").
    @pl.when(q_idx == 0)
    def _():
        x_all = x_ref[0]                                              # (S, D)
        qkv = jnp.dot(x_all, wqkv_ref[...],
                      preferred_element_type=jnp.float32) + bqkv_ref[...]
        q_all[...] = qkv[:, 0 * D:1 * D].astype(cdt)                  # already * 1/sqrt(d_k)
        k_all[...] = qkv[:, 1 * D:2 * D].astype(cdt)
        v_all[...] = qkv[:, 2 * D:3 * D].astype(cdt)

    # Query tile rows (also the residual input) sliced from the resident block.
    row0 = pl.multiple_of(q_idx * q_tile, q_tile)
    xq = x_ref[0, pl.ds(row0, q_tile), :]                             # (TQ, D)
    qt = q_all[pl.ds(row0, q_tile), :]                                # (TQ, D)

    # Additive mask bias, computed once per grid step (hoisted out of head loop).
    m = mask_ref[0, 0]                                                # (TQ, S)
    bias = jnp.where(m == 0.0, jnp.float32(-1e9), jnp.float32(0.0))   # (TQ, S) f32

    for h in range(n_heads):
        sl = slice(h * d_k, (h + 1) * d_k)
        qh = qt[:, sl]                                                # (TQ, d_k)
        kh = k_all[:, sl]                                             # (S, d_k)
        vh = v_all[:, sl]                                             # (S, d_k)
        # Contract last dims directly: no materialized K transpose.
        s = jax.lax.dot_general(qh, kh, (((1,), (1,)), ((), ())),
                                preferred_element_type=jnp.float32) + bias
        s = s - jnp.max(s, axis=-1, keepdims=True)
        p = jnp.exp(s)
        p = p * pl.reciprocal(jnp.sum(p, axis=-1, keepdims=True), approx=True)
        # Write head output at its lane offset (no H-way concatenate).
        heads_scr[:, sl] = jnp.dot(p.astype(cdt), vh,
                                   preferred_element_type=jnp.float32).astype(cdt)

    # combine_heads + single full-depth output projection (K = D).
    attn = jnp.dot(heads_scr[...], wo_ref[...],
                   preferred_element_type=jnp.float32) + bo_ref[...]

    # Residual + LayerNorm 1 (f32 statistics). Dropout == identity (eval mode).
    x1 = _layernorm_f32(xq.astype(jnp.float32) + attn, g1_ref[...], be1_ref[...])

    # Position-wise FFN on the query tile only: (TQ, d_ff) activations.
    h1 = jnp.dot(x1.astype(cdt), w1_ref[...],
                 preferred_element_type=jnp.float32) + b1_ref[...]
    h1 = jnp.maximum(h1, 0.0)
    ff = jnp.dot(h1.astype(cdt), w2_ref[...],
                 preferred_element_type=jnp.float32) + b2_ref[...]

    # Residual + LayerNorm 2.
    y = _layernorm_f32(x1 + ff, g2_ref[...], be2_ref[...])
    out_ref[0] = y.astype(out_ref.dtype)


def encoder_layer(x, mask, params, n_heads, *, q_tile=None):
    B, S, D = x.shape
    d_ff = params["w1"].shape[1]
    assert D % n_heads == 0
    d_k = D // n_heads
    cdt = x.dtype

    # Query-tile size: full S up to 512 (amortizes per-step overhead, better
    # MXU M-utilization); otherwise the largest of 512/256/128 dividing S.
    if q_tile is None:
        if S <= 512:
            q_tile = S
        else:
            q_tile = next((t for t in (512, 256, 128) if S % t == 0), S)
    assert S % q_tile == 0
    nq = S // q_tile

    # ---- wrapper-side layout plumbing (one-time, outside the kernel) ----
    scale = 1.0 / math.sqrt(d_k)
    # Fused QKV weight, 1/sqrt(d_k) folded into the Q columns; cast weights to
    # the activation dtype so MXU operands match (bf16 fast path if applicable).
    wqkv = jnp.concatenate(
        [params["wq"] * scale, params["wk"], params["wv"]], axis=1).astype(cdt)
    bqkv = jnp.concatenate(
        [params["bq"] * scale, params["bk"], params["bv"]], axis=1
    ).astype(jnp.float32)
    wo = params["wo"].astype(cdt)
    w1 = params["w1"].astype(cdt)
    w2 = params["w2"].astype(cdt)
    f32 = lambda a: a.astype(jnp.float32)

    def rep(shape):
        # Whole-array, grid-invariant block: fetched once; request single
        # buffering so it is not double-buffered in VMEM (v7x 64 MiB budget).
        def imap(b, q):
            return (0,) * len(shape)
        try:
            return pl.BlockSpec(shape, imap, pipeline_mode=pl.Buffered(1))
        except Exception:  # older API without pipeline_mode / Buffered(1)
            return pl.BlockSpec(shape, imap)

    in_specs = [
        pl.BlockSpec((1, S, D), lambda b, q: (b, 0, 0)),               # x (full seq)
        pl.BlockSpec((1, 1, q_tile, S), lambda b, q: (b, 0, q, 0)),    # mask tile
        rep((D, 3 * D)), rep((1, 3 * D)),                              # fused Wqkv, bqkv
        rep((D, D)), rep((1, D)),                                      # Wo, bo
        rep((1, D)), rep((1, D)),                                      # LN1 gamma, beta
        rep((D, d_ff)), rep((1, d_ff)),                                # fc1
        rep((d_ff, D)), rep((1, D)),                                   # fc2
        rep((1, D)), rep((1, D)),                                      # LN2 gamma, beta
    ]

    scratch_shapes = [
        pltpu.VMEM((S, D), cdt),        # Q_all (pre-scaled)
        pltpu.VMEM((S, D), cdt),        # K_all
        pltpu.VMEM((S, D), cdt),        # V_all
        pltpu.VMEM((q_tile, D), cdt),   # per-head outputs at lane offsets
    ]

    # VMEM limit derived from the actual chip: ~7/8 of per-core capacity,
    # capped at 100 MiB (v7x -> ~56 MiB, v5e/v6e -> 100 MiB).
    try:
        vmem_cap = pltpu.get_tpu_info().vmem_capacity_bytes
    except Exception:
        vmem_cap = 128 * 1024 * 1024
    vmem_limit = min(int(vmem_cap) * 7 // 8, 100 * 1024 * 1024)

    kernel = functools.partial(encoder_layer_kernel, n_heads=n_heads, q_tile=q_tile)
    return pl.pallas_call(
        kernel,
        out_shape=jax.ShapeDtypeStruct((B, S, D), x.dtype),
        grid=(B, nq),
        in_specs=in_specs,
        out_specs=pl.BlockSpec((1, q_tile, D), lambda b, q: (b, q, 0)),
        scratch_shapes=scratch_shapes,
        compiler_params=pltpu.CompilerParams(
            # q axis carries the projected K/V scratch -> must be "arbitrary";
            # batch axis stays "parallel" for megacore sharding.
            dimension_semantics=("parallel", "arbitrary"),
            vmem_limit_bytes=vmem_limit,
        ),
    )(
        x, mask,
        wqkv, bqkv,
        wo, f32(params["bo"]),
        f32(params["g1"]), f32(params["be1"]),
        w1, f32(params["b1"]), w2, f32(params["b2"]),
        f32(params["g2"]), f32(params["be2"]),
    )


def encoder_layer_ref(x, mask, params, n_heads):
    """Pure-JAX reference mirroring the PyTorch forward (eval mode)."""
    B, S, D = x.shape
    d_k = D // n_heads

    def linear(z, w, b):
        return jnp.einsum("bsd,df->bsf", z, w) + b[0]

    q = linear(x, params["wq"], params["bq"])
    k = linear(x, params["wk"], params["bk"])
    v = linear(x, params["wv"], params["bv"])

    def split(z):  # (B,S,D) -> (B,H,S,d_k)
        return z.reshape(B, S, n_heads, d_k).transpose(0, 2, 1, 3)

    qh, kh, vh = split(q), split(k), split(v)
    scores = jnp.einsum("bhqd,bhkd->bhqk", qh, kh) / math.sqrt(d_k)
    scores = jnp.where(mask == 0.0, -1e9, scores)
    p = jax.nn.softmax(scores, axis=-1)
    a = jnp.einsum("bhqk,bhkd->bhqd", p, vh)
    a = a.transpose(0, 2, 1, 3).reshape(B, S, D)
    attn_out = linear(a, params["wo"], params["bo"])

    def ln(z, g, b):
        mu = jnp.mean(z, axis=-1, keepdims=True)
        var = jnp.mean((z - mu) ** 2, axis=-1, keepdims=True)
        return (z - mu) * jax.lax.rsqrt(var + 1e-5) * g[0] + b[0]

    x1 = ln(x + attn_out, params["g1"], params["be1"])
    h1 = jax.nn.relu(linear(x1, params["w1"], params["b1"]))
    ff = linear(h1, params["w2"], params["b2"])
    return ln(x1 + ff, params["g2"], params["be2"])


def init_params(key, d_model, d_ff):
    ks = jax.random.split(key, 8)
    s = 1.0 / math.sqrt(d_model)
    sf = 1.0 / math.sqrt(d_ff)
    return {
        "wq": jax.random.normal(ks[0], (d_model, d_model), jnp.float32) * s,
        "bq": jax.random.normal(ks[1], (1, d_model), jnp.float32) * 0.01,
        "wk": jax.random.normal(ks[2], (d_model, d_model), jnp.float32) * s,
        "bk": jnp.zeros((1, d_model), jnp.float32),
        "wv": jax.random.normal(ks[3], (d_model, d_model), jnp.float32) * s,
        "bv": jnp.zeros((1, d_model), jnp.float32),
        "wo": jax.random.normal(ks[4], (d_model, d_model), jnp.float32) * s,
        "bo": jax.random.normal(ks[5], (1, d_model), jnp.float32) * 0.01,
        "g1": jnp.ones((1, d_model), jnp.float32),
        "be1": jnp.zeros((1, d_model), jnp.float32),
        "w1": jax.random.normal(ks[6], (d_model, d_ff), jnp.float32) * s,
        "b1": jnp.zeros((1, d_ff), jnp.float32),
        "w2": jax.random.normal(ks[7], (d_ff, d_model), jnp.float32) * sf,
        "b2": jnp.zeros((1, d_model), jnp.float32),
        "g2": jnp.ones((1, d_model), jnp.float32),
        "be2": jnp.zeros((1, d_model), jnp.float32),
    }


if __name__ == "__main__":
    B, S, D, H, D_FF = 2, 8, 32, 4, 64

    key = jax.random.PRNGKey(0)
    kx, km, kp = jax.random.split(key, 3)

    x = jax.random.normal(kx, (B, S, D), jnp.float32)
    # Padding-style mask: 1.0 = attend, 0.0 = masked; last 2 keys masked for b=1.
    mask = jnp.ones((B, 1, S, S), jnp.float32)
    mask = mask.at[1, :, :, S - 2:].set(0.0)

    params = init_params(kp, D, D_FF)

    out = jax.block_until_ready(encoder_layer(x, mask, params, n_heads=H))

    ref = encoder_layer_ref(x, mask, params, n_heads=H)
    # Tolerance slightly loosened vs. a pure-f32 path because the softmax
    # denominator uses the EUP approximate reciprocal (pl.reciprocal approx=True).
    np.testing.assert_allclose(np.asarray(out), np.asarray(ref),
                               rtol=5e-3, atol=5e-3)
    print("KERNEL_OK")
</pallas_src>

<mosaic_0001>
module attributes {stable_mosaic.version = 11 : i64} {
  func.func @encoder_layer_kernel(%arg0: i32, %arg1: i32, %arg2: memref<1x8x32xf32, #tpu.memory_space<vmem>>, %arg3: memref<1x1x8x8xf32, #tpu.memory_space<vmem>>, %arg4: memref<32x96xf32, #tpu.memory_space<vmem>>, %arg5: memref<1x96xf32, #tpu.memory_space<vmem>>, %arg6: memref<32x32xf32, #tpu.memory_space<vmem>>, %arg7: memref<1x32xf32, #tpu.memory_space<vmem>>, %arg8: memref<1x32xf32, #tpu.memory_space<vmem>>, %arg9: memref<1x32xf32, #tpu.memory_space<vmem>>, %arg10: memref<32x64xf32, #tpu.memory_space<vmem>>, %arg11: memref<1x64xf32, #tpu.memory_space<vmem>>, %arg12: memref<64x32xf32, #tpu.memory_space<vmem>>, %arg13: memref<1x32xf32, #tpu.memory_space<vmem>>, %arg14: memref<1x32xf32, #tpu.memory_space<vmem>>, %arg15: memref<1x32xf32, #tpu.memory_space<vmem>>, %arg16: memref<1x8x32xf32, #tpu.memory_space<vmem>>, %arg17: memref<8x32xf32, #tpu.memory_space<vmem>>, %arg18: memref<8x32xf32, #tpu.memory_space<vmem>>, %arg19: memref<8x32xf32, #tpu.memory_space<vmem>>, %arg20: memref<8x32xf32, #tpu.memory_space<vmem>>) attributes {dimension_semantics = [#tpu.dimension_semantics<parallel>, #tpu.dimension_semantics<arbitrary>], iteration_bounds = array<i64: 2, 1>, scalar_prefetch = 0 : i64, scratch_operands = 4 : i64, tpu.core_type = #tpu.core_type<tc>, window_params = [{transform_indices = @transform_0, window_bounds = array<i64: 1, 8, 32>}, {transform_indices = @transform_1, window_bounds = array<i64: 1, 1, 8, 8>}, {pipeline_mode = #tpu.pipeline_mode<synchronous>, transform_indices = @transform_2, window_bounds = array<i64: 32, 96>}, {pipeline_mode = #tpu.pipeline_mode<synchronous>, transform_indices = @transform_3, window_bounds = array<i64: 1, 96>}, {pipeline_mode = #tpu.pipeline_mode<synchronous>, transform_indices = @transform_4, window_bounds = array<i64: 32, 32>}, {pipeline_mode = #tpu.pipeline_mode<synchronous>, transform_indices = @transform_5, window_bounds = array<i64: 1, 32>}, {pipeline_mode = #tpu.pipeline_mode<synchronous>, transform_indices = @transform_6, window_bounds = array<i64: 1, 32>}, {pipeline_mode = #tpu.pipeline_mode<synchronous>, transform_indices = @transform_7, window_bounds = array<i64: 1, 32>}, {pipeline_mode = #tpu.pipeline_mode<synchronous>, transform_indices = @transform_8, window_bounds = array<i64: 32, 64>}, {pipeline_mode = #tpu.pipeline_mode<synchronous>, transform_indices = @transform_9, window_bounds = array<i64: 1, 64>}, {pipeline_mode = #tpu.pipeline_mode<synchronous>, transform_indices = @transform_10, window_bounds = array<i64: 64, 32>}, {pipeline_mode = #tpu.pipeline_mode<synchronous>, transform_indices = @transform_11, window_bounds = array<i64: 1, 32>}, {pipeline_mode = #tpu.pipeline_mode<synchronous>, transform_indices = @transform_12, window_bounds = array<i64: 1, 32>}, {pipeline_mode = #tpu.pipeline_mode<synchronous>, transform_indices = @transform_13, window_bounds = array<i64: 1, 32>}, {transform_indices = @transform_14, window_bounds = array<i64: 1, 8, 32>}]} {
    %c0_i32 = arith.constant 0 : i32
    %0 = arith.cmpi eq, %arg1, %c0_i32 : i32
    %1 = arith.extui %0 : i1 to i32
    %c0_i32_0 = arith.constant 0 : i32
    %2 = arith.cmpi ne, %1, %c0_i32_0 : i32
    scf.if %2 {
      %c0_85 = arith.constant 0 : index
      %c0_86 = arith.constant 0 : index
      %c0_87 = arith.constant 0 : index
      %156 = vector.load %arg2[%c0_85, %c0_86, %c0_87] : memref<1x8x32xf32, #tpu.memory_space<vmem>>, vector<1x8x32xf32>
      %157 = vector.shape_cast %156 : vector<1x8x32xf32> to vector<8x32xf32>
      %c0_88 = arith.constant 0 : index
      %c0_89 = arith.constant 0 : index
      %158 = vector.load %arg4[%c0_88, %c0_89] : memref<32x96xf32, #tpu.memory_space<vmem>>, vector<32x96xf32>
      %cst_90 = arith.constant dense<0.000000e+00> : vector<8x96xf32>
      %159 = tpu.matmul %157, %158, %cst_90 {dimension_numbers = #tpu.dot_dimension_numbers<[1], [0], [0], [1], [0, 0, 1, 1], [], []>} : vector<8x32xf32>, vector<32x96xf32>, vector<8x96xf32> -> vector<8x96xf32>
      %c0_91 = arith.constant 0 : index
      %c0_92 = arith.constant 0 : index
      %160 = vector.load %arg5[%c0_91, %c0_92] : memref<1x96xf32, #tpu.memory_space<vmem>>, vector<1x96xf32>
      %161 = vector.broadcast %160 : vector<1x96xf32> to vector<8x96xf32>
      %162 = arith.addf %159, %161 : vector<8x96xf32>
      %163 = vector.extract_strided_slice %162 {offsets = [0, 0], sizes = [8, 32], strides = [1, 1]} : vector<8x96xf32> to vector<8x32xf32>
      %c0_93 = arith.constant 0 : index
      %c0_94 = arith.constant 0 : index
      %164 = vector.load %arg17[%c0_93, %c0_94] : memref<8x32xf32, #tpu.memory_space<vmem>>, vector<8x32xf32>
      tpu.vector_store %arg17[%c0_93, %c0_94], %163 {strides = array<i32>} : memref<8x32xf32, #tpu.memory_space<vmem>>, vector<8x32xf32>,
      %165 = vector.extract_strided_slice %162 {offsets = [0, 32], sizes = [8, 32], strides = [1, 1]} : vector<8x96xf32> to vector<8x32xf32>
      %c0_95 = arith.constant 0 : index
      %c0_96 = arith.constant 0 : index
      %166 = vector.load %arg18[%c0_95, %c0_96] : memref<8x32xf32, #tpu.memory_space<vmem>>, vector<8x32xf32>
      tpu.vector_store %arg18[%c0_95, %c0_96], %165 {strides = array<i32>} : memref<8x32xf32, #tpu.memory_space<vmem>>, vector<8x32xf32>,
      %167 = vector.extract_strided_slice %162 {offsets = [0, 64], sizes = [8, 32], strides = [1, 1]} : vector<8x96xf32> to vector<8x32xf32>
      %c0_97 = arith.constant 0 : index
      %c0_98 = arith.constant 0 : index
      %168 = vector.load %arg19[%c0_97, %c0_98] : memref<8x32xf32, #tpu.memory_space<vmem>>, vector<8x32xf32>
      tpu.vector_store %arg19[%c0_97, %c0_98], %167 {strides = array<i32>} : memref<8x32xf32, #tpu.memory_space<vmem>>, vector<8x32xf32>,
    } else {
    }
    %c8_i32 = arith.constant 8 : i32
    %3 = arith.muli %arg1, %c8_i32 : i32
    %4 = tpu.assume_multiple %3, 8 : i32
    %c0 = arith.constant 0 : index
    %5 = arith.index_cast %4 : i32 to index
    %c0_1 = arith.constant 0 : index
    %6 = vector.load %arg2[%c0, %5, %c0_1] : memref<1x8x32xf32, #tpu.memory_space<vmem>>, vector<1x8x32xf32>
    %7 = vector.shape_cast %6 : vector<1x8x32xf32> to vector<8x32xf32>
    %8 = arith.index_cast %4 : i32 to index
    %c0_2 = arith.constant 0 : index
    %9 = vector.load %arg17[%8, %c0_2] : memref<8x32xf32, #tpu.memory_space<vmem>>, vector<8x32xf32>
    %c0_3 = arith.constant 0 : index
    %c0_4 = arith.constant 0 : index
    %c0_5 = arith.constant 0 : index
    %c0_6 = arith.constant 0 : index
    %10 = vector.load %arg3[%c0_3, %c0_4, %c0_5, %c0_6] : memref<1x1x8x8xf32, #tpu.memory_space<vmem>>, vector<1x1x8x8xf32>
    %11 = vector.shape_cast %10 : vector<1x1x8x8xf32> to vector<8x8xf32>
    %cst = arith.constant 0.000000e+00 : f32
    %12 = vector.broadcast %cst : f32 to vector<8x8xf32>
    %13 = arith.cmpf oeq, %11, %12 : vector<8x8xf32>
    %cst_7 = arith.constant -1.000000e+09 : f32
    %cst_8 = arith.constant 0.000000e+00 : f32
    %14 = vector.broadcast %cst_7 : f32 to vector<8x8xf32>
    %15 = vector.broadcast %cst_8 : f32 to vector<8x8xf32>
    %16 = arith.select %13, %14, %15 : vector<8x8xi1>, vector<8x8xf32>
    %17 = vector.extract_strided_slice %9 {offsets = [0, 0], sizes = [8, 8], strides = [1, 1]} : vector<8x32xf32> to vector<8x8xf32>
    %c0_9 = arith.constant 0 : index
    %c0_10 = arith.constant 0 : index
    %18 = vector.load %arg18[%c0_9, %c0_10] : memref<8x32xf32, #tpu.memory_space<vmem>>, vector<8x8xf32>
    %c0_11 = arith.constant 0 : index
    %c0_12 = arith.constant 0 : index
    %19 = vector.load %arg19[%c0_11, %c0_12] : memref<8x32xf32, #tpu.memory_space<vmem>>, vector<8x8xf32>
    %cst_13 = arith.constant dense<0.000000e+00> : vector<8x8xf32>
    %20 = tpu.matmul %17, %18, %cst_13 {dimension_numbers = #tpu.dot_dimension_numbers<[1], [1], [0], [0], [0, 0, 1, 0], [], []>} : vector<8x8xf32>, vector<8x8xf32>, vector<8x8xf32> -> vector<8x8xf32>
    %21 = arith.addf %20, %16 : vector<8x8xf32>
    %cst_14 = arith.constant dense<0xFF800000> : vector<8xf32>
    %22 = vector.multi_reduction <maximumf>, %21, %cst_14 [1] : vector<8x8xf32> to vector<8xf32>
    %23 = vector.shape_cast %22 : vector<8xf32> to vector<8x1xf32>
    %24 = vector.broadcast %23 : vector<8x1xf32> to vector<8x8xf32>
    %25 = arith.subf %21, %24 : vector<8x8xf32>
    %26 = math.exp %25 : vector<8x8xf32>
    %cst_15 = arith.constant dense<0.000000e+00> : vector<8xf32>
    %27 = vector.multi_reduction <add>, %26, %cst_15 [1] : vector<8x8xf32> to vector<8xf32>
    %28 = vector.shape_cast %27 : vector<8xf32> to vector<8x1xf32>
    %29 = tpu.reciprocal %28 {approx = true} : vector<8x1xf32> -> vector<8x1xf32>
    %30 = vector.broadcast %29 : vector<8x1xf32> to vector<8x8xf32>
    %31 = arith.mulf %26, %30 : vector<8x8xf32>
    %cst_16 = arith.constant dense<0.000000e+00> : vector<8x8xf32>
    %32 = tpu.matmul %31, %19, %cst_16 {dimension_numbers = #tpu.dot_dimension_numbers<[1], [0], [0], [1], [0, 0, 1, 1], [], []>} : vector<8x8xf32>, vector<8x8xf32>, vector<8x8xf32> -> vector<8x8xf32>
    %c0_17 = arith.constant 0 : index
    %c0_18 = arith.constant 0 : index
    %33 = vector.load %arg20[%c0_17, %c0_18] : memref<8x32xf32, #tpu.memory_space<vmem>>, vector<8x8xf32>
    tpu.vector_store %arg20[%c0_17, %c0_18], %32 {strides = array<i32>} : memref<8x32xf32, #tpu.memory_space<vmem>>, vector<8x8xf32>,
    %34 = vector.extract_strided_slice %9 {offsets = [0, 8], sizes = [8, 8], strides = [1, 1]} : vector<8x32xf32> to vector<8x8xf32>
    %c0_19 = arith.constant 0 : index
    %c8 = arith.constant 8 : index
    %35 = vector.load %arg18[%c0_19, %c8] : memref<8x32xf32, #tpu.memory_space<vmem>>, vector<8x8xf32>
    %c0_20 = arith.constant 0 : index
    %c8_21 = arith.constant 8 : index
    %36 = vector.load %arg19[%c0_20, %c8_21] : memref<8x32xf32, #tpu.memory_space<vmem>>, vector<8x8xf32>
    %cst_22 = arith.constant dense<0.000000e+00> : vector<8x8xf32>
    %37 = tpu.matmul %34, %35, %cst_22 {dimension_numbers = #tpu.dot_dimension_numbers<[1], [1], [0], [0], [0, 0, 1, 0], [], []>} : vector<8x8xf32>, vector<8x8xf32>, vector<8x8xf32> -> vector<8x8xf32>
    %38 = arith.addf %37, %16 : vector<8x8xf32>
    %cst_23 = arith.constant dense<0xFF800000> : vector<8xf32>
    %39 = vector.multi_reduction <maximumf>, %38, %cst_23 [1] : vector<8x8xf32> to vector<8xf32>
    %40 = vector.shape_cast %39 : vector<8xf32> to vector<8x1xf32>
    %41 = vector.broadcast %40 : vector<8x1xf32> to vector<8x8xf32>
    %42 = arith.subf %38, %41 : vector<8x8xf32>
    %43 = math.exp %42 : vector<8x8xf32>
    %cst_24 = arith.constant dense<0.000000e+00> : vector<8xf32>
    %44 = vector.multi_reduction <add>, %43, %cst_24 [1] : vector<8x8xf32> to vector<8xf32>
    %45 = vector.shape_cast %44 : vector<8xf32> to vector<8x1xf32>
    %46 = tpu.reciprocal %45 {approx = true} : vector<8x1xf32> -> vector<8x1xf32>
    %47 = vector.broadcast %46 : vector<8x1xf32> to vector<8x8xf32>
    %48 = arith.mulf %43, %47 : vector<8x8xf32>
    %cst_25 = arith.constant dense<0.000000e+00> : vector<8x8xf32>
    %49 = tpu.matmul %48, %36, %cst_25 {dimension_numbers = #tpu.dot_dimension_numbers<[1], [0], [0], [1], [0, 0, 1, 1], [], []>} : vector<8x8xf32>, vector<8x8xf32>, vector<8x8xf32> -> vector<8x8xf32>
    %c0_26 = arith.constant 0 : index
    %c8_27 = arith.constant 8 : index
    %50 = vector.load %arg20[%c0_26, %c8_27] : memref<8x32xf32, #tpu.memory_space<vmem>>, vector<8x8xf32>
    tpu.vector_store %arg20[%c0_26, %c8_27], %49 {strides = array<i32>} : memref<8x32xf32, #tpu.memory_space<vmem>>, vector<8x8xf32>,
    %51 = vector.extract_strided_slice %9 {offsets = [0, 16], sizes = [8, 8], strides = [1, 1]} : vector<8x32xf32> to vector<8x8xf32>
    %c0_28 = arith.constant 0 : index
    %c16 = arith.constant 16 : index
    %52 = vector.load %arg18[%c0_28, %c16] : memref<8x32xf32, #tpu.memory_space<vmem>>, vector<8x8xf32>
    %c0_29 = arith.constant 0 : index
    %c16_30 = arith.constant 16 : index
    %53 = vector.load %arg19[%c0_29, %c16_30] : memref<8x32xf32, #tpu.memory_space<vmem>>, vector<8x8xf32>
    %cst_31 = arith.constant dense<0.000000e+00> : vector<8x8xf32>
    %54 = tpu.matmul %51, %52, %cst_31 {dimension_numbers = #tpu.dot_dimension_numbers<[1], [1], [0], [0], [0, 0, 1, 0], [], []>} : vector<8x8xf32>, vector<8x8xf32>, vector<8x8xf32> -> vector<8x8xf32>
    %55 = arith.addf %54, %16 : vector<8x8xf32>
    %cst_32 = arith.constant dense<0xFF800000> : vector<8xf32>
    %56 = vector.multi_reduction <maximumf>, %55, %cst_32 [1] : vector<8x8xf32> to vector<8xf32>
    %57 = vector.shape_cast %56 : vector<8xf32> to vector<8x1xf32>
    %58 = vector.broadcast %57 : vector<8x1xf32> to vector<8x8xf32>
    %59 = arith.subf %55, %58 : vector<8x8xf32>
    %60 = math.exp %59 : vector<8x8xf32>
    %cst_33 = arith.constant dense<0.000000e+00> : vector<8xf32>
    %61 = vector.multi_reduction <add>, %60, %cst_33 [1] : vector<8x8xf32> to vector<8xf32>
    %62 = vector.shape_cast %61 : vector<8xf32> to vector<8x1xf32>
    %63 = tpu.reciprocal %62 {approx = true} : vector<8x1xf32> -> vector<8x1xf32>
    %64 = vector.broadcast %63 : vector<8x1xf32> to vector<8x8xf32>
    %65 = arith.mulf %60, %64 : vector<8x8xf32>
    %cst_34 = arith.constant dense<0.000000e+00> : vector<8x8xf32>
    %66 = tpu.matmul %65, %53, %cst_34 {dimension_numbers = #tpu.dot_dimension_numbers<[1], [0], [0], [1], [0, 0, 1, 1], [], []>} : vector<8x8xf32>, vector<8x8xf32>, vector<8x8xf32> -> vector<8x8xf32>
    %c0_35 = arith.constant 0 : index
    %c16_36 = arith.constant 16 : index
    %67 = vector.load %arg20[%c0_35, %c16_36] : memref<8x32xf32, #tpu.memory_space<vmem>>, vector<8x8xf32>
    tpu.vector_store %arg20[%c0_35, %c16_36], %66 {strides = array<i32>} : memref<8x32xf32, #tpu.memory_space<vmem>>, vector<8x8xf32>,
    %68 = vector.extract_strided_slice %9 {offsets = [0, 24], sizes = [8, 8], strides = [1, 1]} : vector<8x32xf32> to vector<8x8xf32>
    %c0_37 = arith.constant 0 : index
    %c24 = arith.constant 24 : index
    %69 = vector.load %arg18[%c0_37, %c24] : memref<8x32xf32, #tpu.memory_space<vmem>>, vector<8x8xf32>
    %c0_38 = arith.constant 0 : index
    %c24_39 = arith.constant 24 : index
    %70 = vector.load %arg19[%c0_38, %c24_39] : memref<8x32xf32, #tpu.memory_space<vmem>>, vector<8x8xf32>
    %cst_40 = arith.constant dense<0.000000e+00> : vector<8x8xf32>
    %71 = tpu.matmul %68, %69, %cst_40 {dimension_numbers = #tpu.dot_dimension_numbers<[1], [1], [0], [0], [0, 0, 1, 0], [], []>} : vector<8x8xf32>, vector<8x8xf32>, vector<8x8xf32> -> vector<8x8xf32>
    %72 = arith.addf %71, %16 : vector<8x8xf32>
    %cst_41 = arith.constant dense<0xFF800000> : vector<8xf32>
    %73 = vector.multi_reduction <maximumf>, %72, %cst_41 [1] : vector<8x8xf32> to vector<8xf32>
    %74 = vector.shape_cast %73 : vector<8xf32> to vector<8x1xf32>
    %75 = vector.broadcast %74 : vector<8x1xf32> to vector<8x8xf32>
    %76 = arith.subf %72, %75 : vector<8x8xf32>
    %77 = math.exp %76 : vector<8x8xf32>
    %cst_42 = arith.constant dense<0.000000e+00> : vector<8xf32>
    %78 = vector.multi_reduction <add>, %77, %cst_42 [1] : vector<8x8xf32> to vector<8xf32>
    %79 = vector.shape_cast %78 : vector<8xf32> to vector<8x1xf32>
    %80 = tpu.reciprocal %79 {approx = true} : vector<8x1xf32> -> vector<8x1xf32>
    %81 = vector.broadcast %80 : vector<8x1xf32> to vector<8x8xf32>
    %82 = arith.mulf %77, %81 : vector<8x8xf32>
    %cst_43 = arith.constant dense<0.000000e+00> : vector<8x8xf32>
    %83 = tpu.matmul %82, %70, %cst_43 {dimension_numbers = #tpu.dot_dimension_numbers<[1], [0], [0], [1], [0, 0, 1, 1], [], []>} : vector<8x8xf32>, vector<8x8xf32>, vector<8x8xf32> -> vector<8x8xf32>
    %c0_44 = arith.constant 0 : index
    %c24_45 = arith.constant 24 : index
    %84 = vector.load %arg20[%c0_44, %c24_45] : memref<8x32xf32, #tpu.memory_space<vmem>>, vector<8x8xf32>
    tpu.vector_store %arg20[%c0_44, %c24_45], %83 {strides = array<i32>} : memref<8x32xf32, #tpu.memory_space<vmem>>, vector<8x8xf32>,
    %c0_46 = arith.constant 0 : index
    %c0_47 = arith.constant 0 : index
    %85 = vector.load %arg20[%c0_46, %c0_47] : memref<8x32xf32, #tpu.memory_space<vmem>>, vector<8x32xf32>
    %c0_48 = arith.constant 0 : index
    %c0_49 = arith.constant 0 : index
    %86 = vector.load %arg6[%c0_48, %c0_49] : memref<32x32xf32, #tpu.memory_space<vmem>>, vector<32x32xf32>
    %cst_50 = arith.constant dense<0.000000e+00> : vector<8x32xf32>
    %87 = tpu.matmul %85, %86, %cst_50 {dimension_numbers = #tpu.dot_dimension_numbers<[1], [0], [0], [1], [0, 0, 1, 1], [], []>} : vector<8x32xf32>, vector<32x32xf32>, vector<8x32xf32> -> vector<8x32xf32>
    %c0_51 = arith.constant 0 : index
    %c0_52 = arith.constant 0 : index
    %88 = vector.load %arg7[%c0_51, %c0_52] : memref<1x32xf32, #tpu.memory_space<vmem>>, vector<1x32xf32>
    %89 = vector.broadcast %88 : vector<1x32xf32> to vector<8x32xf32>
    %90 = arith.addf %87, %89 : vector<8x32xf32>
    %91 = arith.addf %7, %90 : vector<8x32xf32>
    %c0_53 = arith.constant 0 : index
    %c0_54 = arith.constant 0 : index
    %92 = vector.load %arg8[%c0_53, %c0_54] : memref<1x32xf32, #tpu.memory_space<vmem>>, vector<1x32xf32>
    %c0_55 = arith.constant 0 : index
    %c0_56 = arith.constant 0 : index
    %93 = vector.load %arg9[%c0_55, %c0_56] : memref<1x32xf32, #tpu.memory_space<vmem>>, vector<1x32xf32>
    %cst_57 = arith.constant dense<0.000000e+00> : vector<8xf32>
    %94 = vector.multi_reduction <add>, %91, %cst_57 [1] : vector<8x32xf32> to vector<8xf32>
    %95 = vector.shape_cast %94 : vector<8xf32> to vector<8x1xf32>
    %cst_58 = arith.constant 3.200000e+01 : f32
    %96 = vector.broadcast %cst_58 : f32 to vector<8x1xf32>
    %97 = arith.divf %95, %96 : vector<8x1xf32>
    %98 = vector.broadcast %97 : vector<8x1xf32> to vector<8x32xf32>
    %99 = arith.subf %91, %98 : vector<8x32xf32>
    %100 = arith.mulf %99, %99 : vector<8x32xf32>
    %cst_59 = arith.constant dense<0.000000e+00> : vector<8xf32>
    %101 = vector.multi_reduction <add>, %100, %cst_59 [1] : vector<8x32xf32> to vector<8xf32>
    %102 = vector.shape_cast %101 : vector<8xf32> to vector<8x1xf32>
    %cst_60 = arith.constant 3.200000e+01 : f32
    %103 = vector.broadcast %cst_60 : f32 to vector<8x1xf32>
    %104 = arith.divf %102, %103 : vector<8x1xf32>
    %105 = vector.broadcast %97 : vector<8x1xf32> to vector<8x32xf32>
    %106 = arith.subf %91, %105 : vector<8x32xf32>
    %cst_61 = arith.constant 9.99999974E-6 : f32
    %107 = vector.broadcast %cst_61 : f32 to vector<8x1xf32>
    %108 = arith.addf %104, %107 : vector<8x1xf32>
    %109 = math.rsqrt %108 : vector<8x1xf32>
    %110 = vector.broadcast %109 : vector<8x1xf32> to vector<8x32xf32>
    %111 = arith.mulf %106, %110 : vector<8x32xf32>
    %112 = vector.broadcast %92 : vector<1x32xf32> to vector<8x32xf32>
    %113 = arith.mulf %111, %112 : vector<8x32xf32>
    %114 = vector.broadcast %93 : vector<1x32xf32> to vector<8x32xf32>
    %115 = arith.addf %113, %114 : vector<8x32xf32>
    %c0_62 = arith.constant 0 : index
    %c0_63 = arith.constant 0 : index
    %116 = vector.load %arg10[%c0_62, %c0_63] : memref<32x64xf32, #tpu.memory_space<vmem>>, vector<32x64xf32>
    %cst_64 = arith.constant dense<0.000000e+00> : vector<8x64xf32>
    %117 = tpu.matmul %115, %116, %cst_64 {dimension_numbers = #tpu.dot_dimension_numbers<[1], [0], [0], [1], [0, 0, 1, 1], [], []>} : vector<8x32xf32>, vector<32x64xf32>, vector<8x64xf32> -> vector<8x64xf32>
    %c0_65 = arith.constant 0 : index
    %c0_66 = arith.constant 0 : index
    %118 = vector.load %arg11[%c0_65, %c0_66] : memref<1x64xf32, #tpu.memory_space<vmem>>, vector<1x64xf32>
    %119 = vector.broadcast %118 : vector<1x64xf32> to vector<8x64xf32>
    %120 = arith.addf %117, %119 : vector<8x64xf32>
    %cst_67 = arith.constant 0.000000e+00 : f32
    %121 = vector.broadcast %cst_67 : f32 to vector<8x64xf32>
    %122 = arith.maximumf %120, %121 : vector<8x64xf32>
    %c0_68 = arith.constant 0 : index
    %c0_69 = arith.constant 0 : index
    %123 = vector.load %arg12[%c0_68, %c0_69] : memref<64x32xf32, #tpu.memory_space<vmem>>, vector<64x32xf32>
    %cst_70 = arith.constant dense<0.000000e+00> : vector<8x32xf32>
    %124 = tpu.matmul %122, %123, %cst_70 {dimension_numbers = #tpu.dot_dimension_numbers<[1], [0], [0], [1], [0, 0, 1, 1], [], []>} : vector<8x64xf32>, vector<64x32xf32>, vector<8x32xf32> -> vector<8x32xf32>
    %c0_71 = arith.constant 0 : index
    %c0_72 = arith.constant 0 : index
    %125 = vector.load %arg13[%c0_71, %c0_72] : memref<1x32xf32, #tpu.memory_space<vmem>>, vector<1x32xf32>
    %126 = vector.broadcast %125 : vector<1x32xf32> to vector<8x32xf32>
    %127 = arith.addf %124, %126 : vector<8x32xf32>
    %128 = arith.addf %115, %127 : vector<8x32xf32>
    %c0_73 = arith.constant 0 : index
    %c0_74 = arith.constant 0 : index
    %129 = vector.load %arg14[%c0_73, %c0_74] : memref<1x32xf32, #tpu.memory_space<vmem>>, vector<1x32xf32>
    %c0_75 = arith.constant 0 : index
    %c0_76 = arith.constant 0 : index
    %130 = vector.load %arg15[%c0_75, %c0_76] : memref<1x32xf32, #tpu.memory_space<vmem>>, vector<1x32xf32>
    %cst_77 = arith.constant dense<0.000000e+00> : vector<8xf32>
    %131 = vector.multi_reduction <add>, %128, %cst_77 [1] : vector<8x32xf32> to vector<8xf32>
    %132 = vector.shape_cast %131 : vector<8xf32> to vector<8x1xf32>
    %cst_78 = arith.constant 3.200000e+01 : f32
    %133 = vector.broadcast %cst_78 : f32 to vector<8x1xf32>
    %134 = arith.divf %132, %133 : vector<8x1xf32>
    %135 = vector.broadcast %134 : vector<8x1xf32> to vector<8x32xf32>
    %136 = arith.subf %128, %135 : vector<8x32xf32>
    %137 = arith.mulf %136, %136 : vector<8x32xf32>
    %cst_79 = arith.constant dense<0.000000e+00> : vector<8xf32>
    %138 = vector.multi_reduction <add>, %137, %cst_79 [1] : vector<8x32xf32> to vector<8xf32>
    %139 = vector.shape_cast %138 : vector<8xf32> to vector<8x1xf32>
    %cst_80 = arith.constant 3.200000e+01 : f32
    %140 = vector.broadcast %cst_80 : f32 to vector<8x1xf32>
    %141 = arith.divf %139, %140 : vector<8x1xf32>
    %142 = vector.broadcast %134 : vector<8x1xf32> to vector<8x32xf32>
    %143 = arith.subf %128, %142 : vector<8x32xf32>
    %cst_81 = arith.constant 9.99999974E-6 : f32
    %144 = vector.broadcast %cst_81 : f32 to vector<8x1xf32>
    %145 = arith.addf %141, %144 : vector<8x1xf32>
    %146 = math.rsqrt %145 : vector<8x1xf32>
    %147 = vector.broadcast %146 : vector<8x1xf32> to vector<8x32xf32>
    %148 = arith.mulf %143, %147 : vector<8x32xf32>
    %149 = vector.broadcast %129 : vector<1x32xf32> to vector<8x32xf32>
    %150 = arith.mulf %148, %149 : vector<8x32xf32>
    %151 = vector.broadcast %130 : vector<1x32xf32> to vector<8x32xf32>
    %152 = arith.addf %150, %151 : vector<8x32xf32>
    %c0_82 = arith.constant 0 : index
    %c0_83 = arith.constant 0 : index
    %c0_84 = arith.constant 0 : index
    %153 = vector.load %arg16[%c0_82, %c0_83, %c0_84] : memref<1x8x32xf32, #tpu.memory_space<vmem>>, vector<1x8x32xf32>
    %154 = vector.shape_cast %153 : vector<1x8x32xf32> to vector<8x32xf32>
    %155 = vector.shape_cast %152 : vector<8x32xf32> to vector<1x8x32xf32>
    tpu.vector_store %arg16[%c0_82, %c0_83, %c0_84], %155 {strides = array<i32>} : memref<1x8x32xf32, #tpu.memory_space<vmem>>, vector<1x8x32xf32>,
    return
  }
  func.func @transform_0(%arg0: i32, %arg1: i32) -> (i32, i32, i32) {
    %c0_i32 = arith.constant 0 : i32
    %c0_i32_0 = arith.constant 0 : i32
    %c0_i32_1 = arith.constant 0 : i32
    return %arg0, %c0_i32, %c0_i32_0 : i32, i32, i32
  }
  func.func @transform_1(%arg0: i32, %arg1: i32) -> (i32, i32, i32, i32) {
    %c0_i32 = arith.constant 0 : i32
    %c0_i32_0 = arith.constant 0 : i32
    %c0_i32_1 = arith.constant 0 : i32
    return %arg0, %c0_i32, %arg1, %c0_i32_0 : i32, i32, i32, i32
  }
  func.func @transform_2(%arg0: i32, %arg1: i32) -> (i32, i32) {
    %c0_i32 = arith.constant 0 : i32
    %c0_i32_0 = arith.constant 0 : i32
    %c0_i32_1 = arith.constant 0 : i32
    return %c0_i32, %c0_i32_0 : i32, i32
  }
  func.func @transform_3(%arg0: i32, %arg1: i32) -> (i32, i32) {
    %c0_i32 = arith.constant 0 : i32
    %c0_i32_0 = arith.constant 0 : i32
    %c0_i32_1 = arith.constant 0 : i32
    return %c0_i32, %c0_i32_0 : i32, i32
  }
  func.func @transform_4(%arg0: i32, %arg1: i32) -> (i32, i32) {
    %c0_i32 = arith.constant 0 : i32
    %c0_i32_0 = arith.constant 0 : i32
    %c0_i32_1 = arith.constant 0 : i32
    return %c0_i32, %c0_i32_0 : i32, i32
  }
  func.func @transform_5(%arg0: i32, %arg1: i32) -> (i32, i32) {
    %c0_i32 = arith.constant 0 : i32
    %c0_i32_0 = arith.constant 0 : i32
    %c0_i32_1 = arith.constant 0 : i32
    return %c0_i32, %c0_i32_0 : i32, i32
  }
  func.func @transform_6(%arg0: i32, %arg1: i32) -> (i32, i32) {
    %c0_i32 = arith.constant 0 : i32
    %c0_i32_0 = arith.constant 0 : i32
    %c0_i32_1 = arith.constant 0 : i32
    return %c0_i32, %c0_i32_0 : i32, i32
  }
  func.func @transform_7(%arg0: i32, %arg1: i32) -> (i32, i32) {
    %c0_i32 = arith.constant 0 : i32
    %c0_i32_0 = arith.constant 0 : i32
    %c0_i32_1 = arith.constant 0 : i32
    return %c0_i32, %c0_i32_0 : i32, i32
  }
  func.func @transform_8(%arg0: i32, %arg1: i32) -> (i32, i32) {
    %c0_i32 = arith.constant 0 : i32
    %c0_i32_0 = arith.constant 0 : i32
    %c0_i32_1 = arith.constant 0 : i32
    return %c0_i32, %c0_i32_0 : i32, i32
  }
  func.func @transform_9(%arg0: i32, %arg1: i32) -> (i32, i32) {
    %c0_i32 = arith.constant 0 : i32
    %c0_i32_0 = arith.constant 0 : i32
    %c0_i32_1 = arith.constant 0 : i32
    return %c0_i32, %c0_i32_0 : i32, i32
  }
  func.func @transform_10(%arg0: i32, %arg1: i32) -> (i32, i32) {
    %c0_i32 = arith.constant 0 : i32
    %c0_i32_0 = arith.constant 0 : i32
    %c0_i32_1 = arith.constant 0 : i32
    return %c0_i32, %c0_i32_0 : i32, i32
  }
  func.func @transform_11(%arg0: i32, %arg1: i32) -> (i32, i32) {
    %c0_i32 = arith.constant 0 : i32
    %c0_i32_0 = arith.constant 0 : i32
    %c0_i32_1 = arith.constant 0 : i32
    return %c0_i32, %c0_i32_0 : i32, i32
  }
  func.func @transform_12(%arg0: i32, %arg1: i32) -> (i32, i32) {
    %c0_i32 = arith.constant 0 : i32
    %c0_i32_0 = arith.constant 0 : i32
    %c0_i32_1 = arith.constant 0 : i32
    return %c0_i32, %c0_i32_0 : i32, i32
  }
  func.func @transform_13(%arg0: i32, %arg1: i32) -> (i32, i32) {
    %c0_i32 = arith.constant 0 : i32
    %c0_i32_0 = arith.constant 0 : i32
    %c0_i32_1 = arith.constant 0 : i32
    return %c0_i32, %c0_i32_0 : i32, i32
  }
  func.func @transform_14(%arg0: i32, %arg1: i32) -> (i32, i32, i32) {
    %c0_i32 = arith.constant 0 : i32
    %c0_i32_0 = arith.constant 0 : i32
    return %arg0, %arg1, %c0_i32 : i32, i32, i32
  }
}

</mosaic_0001>

<llo_original>
// kernel: tpu_custom_call.1
$region0: #{tpu_custom_call.1}
  #allocation0 [shape = 'u32[]', space=smem, size = 0x4, offset = 0x4, fixed_abs, tag = 'smem constant byte address 0x4 - core index']
  #allocation1 [shape = 'u32[144,128]{1,0:T(1,128)}', space=vmem, size = 0x12000, scoped, tag = 'internal scratch']
  #allocation2 [shape = 'f32[8,32]{1,0:T(8,128)}', space=vmem, size = 0x1000, scoped, tag = 'scratch operand']
  #allocation3 [shape = 'f32[8,32]{1,0:T(8,128)}', space=vmem, size = 0x1000, scoped, tag = 'scratch operand']
  #allocation4 [shape = 'f32[8,32]{1,0:T(8,128)}', space=vmem, size = 0x1000, scoped, tag = 'scratch operand']
  #allocation5 [shape = 'f32[8,32]{1,0:T(8,128)}', space=vmem, size = 0x1000, scoped, tag = 'scratch operand']
  %s0 = inlined_call_operand.hbm [shape: f32[2,8,32], index: 0, kind: input, shape index: {}]
  %s1 = inlined_call_operand.hbm [shape: f32[2,1,8,8], index: 1, kind: input, shape index: {}]
  %s2 = inlined_call_operand.vmem [shape: f32[32,96], index: 2, kind: input, shape index: {}]
  %s3 = inlined_call_operand.vmem [shape: f32[1,96], index: 3, kind: input, shape index: {}]
  %s4 = inlined_call_operand.vmem [shape: f32[32,32], index: 4, kind: input, shape index: {}]
  %s5 = inlined_call_operand.vmem [shape: f32[1,32], index: 5, kind: input, shape index: {}]
  %s6 = inlined_call_operand.vmem [shape: f32[1,32], index: 6, kind: input, shape index: {}]
  %s7 = inlined_call_operand.vmem [shape: f32[1,32], index: 7, kind: input, shape index: {}]
  %s8 = inlined_call_operand.vmem [shape: f32[32,64], index: 8, kind: input, shape index: {}]
  %s9 = inlined_call_operand.vmem [shape: f32[1,64], index: 9, kind: input, shape index: {}]
  %s10 = inlined_call_operand.vmem [shape: f32[64,32], index: 10, kind: input, shape index: {}]
  %s11 = inlined_call_operand.vmem [shape: f32[1,32], index: 11, kind: input, shape index: {}]
  %s12 = inlined_call_operand.vmem [shape: f32[1,32], index: 12, kind: input, shape index: {}]
  %s13 = inlined_call_operand.vmem [shape: f32[1,32], index: 13, kind: input, shape index: {}]
  %s14 = inlined_call_operand.hbm [shape: f32[2,8,32], index: 14, kind: output, shape index: {}]
  %s15 = sld [smem:[#allocation0]]
  $region101: #{tpu_custom_call.1} parent=0
    _
  %s17 = ssub.s32 1, %s15
  %s18 = scalar_select 0, %s17, %s15
  $region1: #{tpu_custom_call.1} parent=0
    #allocation6 [shape = 'u8[8192]{0}', space=vmem, size = 0x2000, scoped, tag = 'input window, operand 0']
    #allocation7 [shape = 's32[2]{0}', space=sflag, size = 0x8, scoped, tag = 'scoped memory for tpu_custom_call.1']
    #allocation8 [shape = 's32[2]{0}', space=sflag, size = 0x8, scoped, tag = 'scoped memory for tpu_custom_call.1']
    #allocation9 [shape = 'u8[8192]{0}', space=vmem, size = 0x2000, scoped, tag = 'input window, operand 1']
    #allocation10 [shape = 's32[2]{0}', space=sflag, size = 0x8, scoped, tag = 'scoped memory for tpu_custom_call.1']
    #allocation11 [shape = 'u8[8192]{0}', space=vmem, size = 0x2000, scoped, tag = 'output window, operand 0']
    %19 = vsyncpa [#allocation7], 0
    %s20 = scalar_lea.sflag [#allocation7], 1
    %21 = vsyncpa %s20, 0
    %22 = vsyncpa [#allocation10], 0
    %s23 = scalar_lea.sflag [#allocation10], 1
    %24 = vsyncpa %s23, 0
    %25 = vsyncpa [#allocation8], 0
    %s26 = scalar_lea.sflag [#allocation8], 1
    %27 = vsyncpa %s26, 0
    loop: start=0, step=1, limit=4
    $region2: #{tpu_custom_call.1} parent=1 // loop_pre_header
      _
    $region3: #{tpu_custom_call.1} parent=1 // loop_header
      %s29 = sphi 0, %s33
      %p30 = scmp.ge.s32.totalorder %s29, 4
      %s36 = sphi 0, %s48
      %s37 = sphi 0, %s44
      %s38 = sphi 0, %s36
      %s39 = sphi 0, %s37
      %s40 = sphi 0, %s38
      %s41 = sphi 0, %s39
      %s51 = sphi 0, %s53
      %s54 = sphi 0, %s51
      %s55 = sphi 0, %s54
      %s71 = sphi 0, %s55
      %s79 = sphi 0, %s81
      %s82 = sphi 0, %s79
      %s83 = sphi 0, %s82
      %s99 = sphi 0, %s83
      %s103 = sphi 0, %s103
      %s105 = sphi 0, %s103
      %s106 = sphi 0, %s105
      %s120 = sphi 0, %s106
      %s124 = sphi 0, %s124
      %s126 = sphi 0, %s124
      %s127 = sphi 0, %s126
      %s141 = sphi 0, %s127
      %s145 = sphi 0, %s145
      %s147 = sphi 0, %s145
      %s148 = sphi 0, %s147
      %s162 = sphi 0, %s148
      %s166 = sphi 0, %s166
      %s168 = sphi 0, %s166
      %s169 = sphi 0, %s168
      %s183 = sphi 0, %s169
      %s187 = sphi 0, %s187
      %s189 = sphi 0, %s187
      %s190 = sphi 0, %s189
      %s204 = sphi 0, %s190
      %s208 = sphi 0, %s208
      %s210 = sphi 0, %s208
      %s211 = sphi 0, %s210
      %s225 = sphi 0, %s211
      %s229 = sphi 0, %s229
      %s231 = sphi 0, %s229
      %s232 = sphi 0, %s231
      %s246 = sphi 0, %s232
      %s250 = sphi 0, %s250
      %s252 = sphi 0, %s250
      %s253 = sphi 0, %s252
      %s267 = sphi 0, %s253
      %s271 = sphi 0, %s271
      %s273 = sphi 0, %s271
      %s274 = sphi 0, %s273
      %s288 = sphi 0, %s274
      %s292 = sphi 0, %s292
      %s294 = sphi 0, %s292
      %s295 = sphi 0, %s294
      %s309 = sphi 0, %s295
      %s313 = sphi 0, %s313
      %s315 = sphi 0, %s313
      %s316 = sphi 0, %s315
      %s330 = sphi 0, %s316
      %s334 = sphi 0, %s334
      %s336 = sphi 0, %s334
      %s337 = sphi 0, %s336
      %s351 = sphi 0, %s337
      %s359 = sphi 0, %s361
      %s362 = sphi 0, %s359
      %s363 = sphi 0, %s362
      %s379 = sphi 0, %s363
    $region4: #{tpu_custom_call.1} parent=1 // loop_header_branch
      %32 = sbr.rel (%p30) target = $region8
    $region5: #{tpu_custom_call.1} parent=1 // loop_body
      %s34 = ssub.s32 %s29, 1
      %s35 = ssub.s32 %s29, 2
      %s42 = sadd.s32 1, %s37
      %p43 = scmp.ge.s32.totalorder %s42, 1
      %s44 = scalar_select %p43, 0, %s42
      %s45 = sadd.s32 1, %s36
      %s46 = scalar_select %p43, %s45, %s36
      %p47 = scmp.ge.s32.totalorder %s46, 2
      %s48 = scalar_select %p47, 0, %s46
      %s49 = ssub.s32 %s36, %s48
      %p50 = scmp.eq.s32.totalorder %s49, 0
      %s52 = sadd.s32 %s51, 1
      %s53 = scalar_select %p50, %s51, %s52
      %p56 = pneg %p50
      %p57 = scmp.eq.s32.totalorder %s29, 1
      %p58 = por %p56, %p57
      %p59 = scmp.ne.s32.totalorder %s51, %s54
      %p60 = scmp.eq.s32.totalorder %s29, 0
      %p61 = por %p59, %p60
      %p62 = scmp.ne.s32.totalorder %s51, %s54
      %p63 = scmp.eq.s32.totalorder %s34, 1
      %p64 = por %p62, %p63
      %p65 = scmp.ne.s32.totalorder %s54, %s55
      %p66 = scmp.eq.s32.totalorder %s34, 0
      %p67 = por %p65, %p66
      %p68 = scmp.ne.s32.totalorder %s54, %s55
      %p69 = scmp.eq.s32.totalorder %s35, 1
      %p70 = por %p68, %p69
      %p72 = scmp.ne.s32.totalorder %s55, %s71
      %p73 = scmp.eq.s32.totalorder %s35, 0
      %p74 = por %p72, %p73
      %s75 = ssub.s32 %s36, %s48
      %s76 = ssub.s32 %s37, %s44
      %s77 = sor.u32 %s75, %s76
      %p78 = scmp.eq.s32.totalorder %s77, 0
      %s80 = sadd.s32 %s79, 1
      %s81 = scalar_select %p78, %s79, %s80
      %p84 = pneg %p78
      %p85 = scmp.eq.s32.totalorder %s29, 1
      %p86 = por %p84, %p85
      %p87 = scmp.ne.s32.totalorder %s79, %s82
      %p88 = scmp.eq.s32.totalorder %s29, 0
      %p89 = por %p87, %p88
      %p90 = scmp.ne.s32.totalorder %s79, %s82
      %p91 = scmp.eq.s32.totalorder %s34, 1
      %p92 = por %p90, %p91
      %p93 = scmp.ne.s32.totalorder %s82, %s83
      %p94 = scmp.eq.s32.totalorder %s34, 0
      %p95 = por %p93, %p94
      %p96 = scmp.ne.s32.totalorder %s82, %s83
      %p97 = scmp.eq.s32.totalorder %s35, 1
      %p98 = por %p96, %p97
      %p100 = scmp.ne.s32.totalorder %s83, %s99
      %p101 = scmp.eq.s32.totalorder %s35, 0
      %p102 = por %p100, %p101
      %s104 = sadd.s32 %s103, 1
      %p107 = scmp.eq.s32.totalorder %s29, 1
      %p108 = scmp.ne.s32.totalorder %s103, %s105
      %p109 = scmp.eq.s32.totalorder %s29, 0
      %p110 = por %p108, %p109
      %p111 = scmp.ne.s32.totalorder %s103, %s105
      %p112 = scmp.eq.s32.totalorder %s34, 1
      %p113 = por %p111, %p112
      %p114 = scmp.ne.s32.totalorder %s105, %s106
      %p115 = scmp.eq.s32.totalorder %s34, 0
      %p116 = por %p114, %p115
      %p117 = scmp.ne.s32.totalorder %s105, %s106
      %p118 = scmp.eq.s32.totalorder %s35, 1
      %p119 = por %p117, %p118
      %p121 = scmp.ne.s32.totalorder %s106, %s120
      %p122 = scmp.eq.s32.totalorder %s35, 0
      %p123 = por %p121, %p122
      %s125 = sadd.s32 %s124, 1
      %p128 = scmp.eq.s32.totalorder %s29, 1
      %p129 = scmp.ne.s32.totalorder %s124, %s126
      %p130 = scmp.eq.s32.totalorder %s29, 0
      %p131 = por %p129, %p130
      %p132 = scmp.ne.s32.totalorder %s124, %s126
      %p133 = scmp.eq.s32.totalorder %s34, 1
      %p134 = por %p132, %p133
      %p135 = scmp.ne.s32.totalorder %s126, %s127
      %p136 = scmp.eq.s32.totalorder %s34, 0
      %p137 = por %p135, %p136
      %p138 = scmp.ne.s32.totalorder %s126, %s127
      %p139 = scmp.eq.s32.totalorder %s35, 1
      %p140 = por %p138, %p139
      %p142 = scmp.ne.s32.totalorder %s127, %s141
      %p143 = scmp.eq.s32.totalorder %s35, 0
      %p144 = por %p142, %p143
      %s146 = sadd.s32 %s145, 1
      %p149 = scmp.eq.s32.totalorder %s29, 1
      %p150 = scmp.ne.s32.totalorder %s145, %s147
      %p151 = scmp.eq.s32.totalorder %s29, 0
      %p152 = por %p150, %p151
      %p153 = scmp.ne.s32.totalorder %s145, %s147
      %p154 = scmp.eq.s32.totalorder %s34, 1
      %p155 = por %p153, %p154
      %p156 = scmp.ne.s32.totalorder %s147, %s148
      %p157 = scmp.eq.s32.totalorder %s34, 0
      %p158 = por %p156, %p157
      %p159 = scmp.ne.s32.totalorder %s147, %s148
      %p160 = scmp.eq.s32.totalorder %s35, 1
      %p161 = por %p159, %p160
      %p163 = scmp.ne.s32.totalorder %s148, %s162
      %p164 = scmp.eq.s32.totalorder %s35, 0
      %p165 = por %p163, %p164
      %s167 = sadd.s32 %s166, 1
      %p170 = scmp.eq.s32.totalorder %s29, 1
      %p171 = scmp.ne.s32.totalorder %s166, %s168
      %p172 = scmp.eq.s32.totalorder %s29, 0
      %p173 = por %p171, %p172
      %p174 = scmp.ne.s32.totalorder %s166, %s168
      %p175 = scmp.eq.s32.totalorder %s34, 1
      %p176 = por %p174, %p175
      %p177 = scmp.ne.s32.totalorder %s168, %s169
      %p178 = scmp.eq.s32.totalorder %s34, 0
      %p179 = por %p177, %p178
      %p180 = scmp.ne.s32.totalorder %s168, %s169
      %p181 = scmp.eq.s32.totalorder %s35, 1
      %p182 = por %p180, %p181
      %p184 = scmp.ne.s32.totalorder %s169, %s183
      %p185 = scmp.eq.s32.totalorder %s35, 0
      %p186 = por %p184, %p185
      %s188 = sadd.s32 %s187, 1
      %p191 = scmp.eq.s32.totalorder %s29, 1
      %p192 = scmp.ne.s32.totalorder %s187, %s189
      %p193 = scmp.eq.s32.totalorder %s29, 0
      %p194 = por %p192, %p193
      %p195 = scmp.ne.s32.totalorder %s187, %s189
      %p196 = scmp.eq.s32.totalorder %s34, 1
      %p197 = por %p195, %p196
      %p198 = scmp.ne.s32.totalorder %s189, %s190
      %p199 = scmp.eq.s32.totalorder %s34, 0
      %p200 = por %p198, %p199
      %p201 = scmp.ne.s32.totalorder %s189, %s190
      %p202 = scmp.eq.s32.totalorder %s35, 1
      %p203 = por %p201, %p202
      %p205 = scmp.ne.s32.totalorder %s190, %s204
      %p206 = scmp.eq.s32.totalorder %s35, 0
      %p207 = por %p205, %p206
      %s209 = sadd.s32 %s208, 1
      %p212 = scmp.eq.s32.totalorder %s29, 1
      %p213 = scmp.ne.s32.totalorder %s208, %s210
      %p214 = scmp.eq.s32.totalorder %s29, 0
      %p215 = por %p213, %p214
      %p216 = scmp.ne.s32.totalorder %s208, %s210
      %p217 = scmp.eq.s32.totalorder %s34, 1
      %p218 = por %p216, %p217
      %p219 = scmp.ne.s32.totalorder %s210, %s211
      %p220 = scmp.eq.s32.totalorder %s34, 0
      %p221 = por %p219, %p220
      %p222 = scmp.ne.s32.totalorder %s210, %s211
      %p223 = scmp.eq.s32.totalorder %s35, 1
      %p224 = por %p222, %p223
      %p226 = scmp.ne.s32.totalorder %s211, %s225
      %p227 = scmp.eq.s32.totalorder %s35, 0
      %p228 = por %p226, %p227
      %s230 = sadd.s32 %s229, 1
      %p233 = scmp.eq.s32.totalorder %s29, 1
      %p234 = scmp.ne.s32.totalorder %s229, %s231
      %p235 = scmp.eq.s32.totalorder %s29, 0
      %p236 = por %p234, %p235
      %p237 = scmp.ne.s32.totalorder %s229, %s231
      %p238 = scmp.eq.s32.totalorder %s34, 1
      %p239 = por %p237, %p238
      %p240 = scmp.ne.s32.totalorder %s231, %s232
      %p241 = scmp.eq.s32.totalorder %s34, 0
      %p242 = por %p240, %p241
      %p243 = scmp.ne.s32.totalorder %s231, %s232
      %p244 = scmp.eq.s32.totalorder %s35, 1
      %p245 = por %p243, %p244
      %p247 = scmp.ne.s32.totalorder %s232, %s246
      %p248 = scmp.eq.s32.totalorder %s35, 0
      %p249 = por %p247, %p248
      %s251 = sadd.s32 %s250, 1
      %p254 = scmp.eq.s32.totalorder %s29, 1
      %p255 = scmp.ne.s32.totalorder %s250, %s252
      %p256 = scmp.eq.s32.totalorder %s29, 0
      %p257 = por %p255, %p256
      %p258 = scmp.ne.s32.totalorder %s250, %s252
      %p259 = scmp.eq.s32.totalorder %s34, 1
      %p260 = por %p258, %p259
      %p261 = scmp.ne.s32.totalorder %s252, %s253
      %p262 = scmp.eq.s32.totalorder %s34, 0
      %p263 = por %p261, %p262
      %p264 = scmp.ne.s32.totalorder %s252, %s253
      %p265 = scmp.eq.s32.totalorder %s35, 1
      %p266 = por %p264, %p265
      %p268 = scmp.ne.s32.totalorder %s253, %s267
      %p269 = scmp.eq.s32.totalorder %s35, 0
      %p270 = por %p268, %p269
      %s272 = sadd.s32 %s271, 1
      %p275 = scmp.eq.s32.totalorder %s29, 1
      %p276 = scmp.ne.s32.totalorder %s271, %s273
      %p277 = scmp.eq.s32.totalorder %s29, 0
      %p278 = por %p276, %p277
      %p279 = scmp.ne.s32.totalorder %s271, %s273
      %p280 = scmp.eq.s32.totalorder %s34, 1
      %p281 = por %p279, %p280
      %p282 = scmp.ne.s32.totalorder %s273, %s274
      %p283 = scmp.eq.s32.totalorder %s34, 0
      %p284 = por %p282, %p283
      %p285 = scmp.ne.s32.totalorder %s273, %s274
      %p286 = scmp.eq.s32.totalorder %s35, 1
      %p287 = por %p285, %p286
      %p289 = scmp.ne.s32.totalorder %s274, %s288
      %p290 = scmp.eq.s32.totalorder %s35, 0
      %p291 = por %p289, %p290
      %s293 = sadd.s32 %s292, 1
      %p296 = scmp.eq.s32.totalorder %s29, 1
      %p297 = scmp.ne.s32.totalorder %s292, %s294
      %p298 = scmp.eq.s32.totalorder %s29, 0
      %p299 = por %p297, %p298
      %p300 = scmp.ne.s32.totalorder %s292, %s294
      %p301 = scmp.eq.s32.totalorder %s34, 1
      %p302 = por %p300, %p301
      %p303 = scmp.ne.s32.totalorder %s294, %s295
      %p304 = scmp.eq.s32.totalorder %s34, 0
      %p305 = por %p303, %p304
      %p306 = scmp.ne.s32.totalorder %s294, %s295
      %p307 = scmp.eq.s32.totalorder %s35, 1
      %p308 = por %p306, %p307
      %p310 = scmp.ne.s32.totalorder %s295, %s309
      %p311 = scmp.eq.s32.totalorder %s35, 0
      %p312 = por %p310, %p311
      %s314 = sadd.s32 %s313, 1
      %p317 = scmp.eq.s32.totalorder %s29, 1
      %p318 = scmp.ne.s32.totalorder %s313, %s315
      %p319 = scmp.eq.s32.totalorder %s29, 0
      %p320 = por %p318, %p319
      %p321 = scmp.ne.s32.totalorder %s313, %s315
      %p322 = scmp.eq.s32.totalorder %s34, 1
      %p323 = por %p321, %p322
      %p324 = scmp.ne.s32.totalorder %s315, %s316
      %p325 = scmp.eq.s32.totalorder %s34, 0
      %p326 = por %p324, %p325
      %p327 = scmp.ne.s32.totalorder %s315, %s316
      %p328 = scmp.eq.s32.totalorder %s35, 1
      %p329 = por %p327, %p328
      %p331 = scmp.ne.s32.totalorder %s316, %s330
      %p332 = scmp.eq.s32.totalorder %s35, 0
      %p333 = por %p331, %p332
      %s335 = sadd.s32 %s334, 1
      %p338 = scmp.eq.s32.totalorder %s29, 1
      %p339 = scmp.ne.s32.totalorder %s334, %s336
      %p340 = scmp.eq.s32.totalorder %s29, 0
      %p341 = por %p339, %p340
      %p342 = scmp.ne.s32.totalorder %s334, %s336
      %p343 = scmp.eq.s32.totalorder %s34, 1
      %p344 = por %p342, %p343
      %p345 = scmp.ne.s32.totalorder %s336, %s337
      %p346 = scmp.eq.s32.totalorder %s34, 0
      %p347 = por %p345, %p346
      %p348 = scmp.ne.s32.totalorder %s336, %s337
      %p349 = scmp.eq.s32.totalorder %s35, 1
      %p350 = por %p348, %p349
      %p352 = scmp.ne.s32.totalorder %s337, %s351
      %p353 = scmp.eq.s32.totalorder %s35, 0
      %p354 = por %p352, %p353
      %s355 = ssub.s32 %s36, %s48
      %s356 = ssub.s32 %s37, %s44
      %s357 = sor.u32 %s355, %s356
      %p358 = scmp.eq.s32.totalorder %s357, 0
      %s360 = sadd.s32 %s359, 1
      %s361 = scalar_select %p358, %s359, %s360
      %p364 = pneg %p358
      %p365 = scmp.eq.s32.totalorder %s29, 1
      %p366 = por %p364, %p365
      %p367 = scmp.ne.s32.totalorder %s359, %s362
      %p368 = scmp.eq.s32.totalorder %s29, 0
      %p369 = por %p367, %p368
      %p370 = scmp.ne.s32.totalorder %s359, %s362
      %p371 = scmp.eq.s32.totalorder %s34, 1
      %p372 = por %p370, %p371
      %p373 = scmp.ne.s32.totalorder %s362, %s363
      %p374 = scmp.eq.s32.totalorder %s34, 0
      %p375 = por %p373, %p374
      %p376 = scmp.ne.s32.totalorder %s362, %s363
      %p377 = scmp.eq.s32.totalorder %s35, 1
      %p378 = por %p376, %p377
      %p380 = scmp.ne.s32.totalorder %s363, %s379
      %p381 = scmp.eq.s32.totalorder %s35, 0
      %p382 = por %p380, %p381
      %p383 = scmp.le.s32.totalorder 1, %s29
      %p384 = scmp.lt.s32.totalorder %s29, 3
      %p385 = pnand %p383, %p384
      %p386 = pneg %p385
      // Predicated region
      $region9: #{tpu_custom_call.1} parent=5 // pred_check
        _
      $region10: #{tpu_custom_call.1} parent=5 // pred_check_branch
        %388 = sbr.rel (%p385) target = $region12
      $region11: #{tpu_custom_call.1} parent=5 // pred_region
        %s389 = ssub.s32 %s29, 1
        // Predicated region
        $region13: #{tpu_custom_call.1} parent=11 // pred_check
          %p390 = pneg %p116
        $region14: #{tpu_custom_call.1} parent=11 // pred_check_branch
          %392 = sbr.rel (%p390) target = $region16
        $region15: #{tpu_custom_call.1} parent=11 // pred_region
          _
        $region16: #{tpu_custom_call.1} parent=11 // pred_fallthru
          _
        // Predicated region
        $region17: #{tpu_custom_call.1} parent=11 // pred_check
          %p393 = pneg %p137
        $region18: #{tpu_custom_call.1} parent=11 // pred_check_branch
          %395 = sbr.rel (%p393) target = $region20
        $region19: #{tpu_custom_call.1} parent=11 // pred_region
          _
        $region20: #{tpu_custom_call.1} parent=11 // pred_fallthru
          _
        // Predicated region
        $region21: #{tpu_custom_call.1} parent=11 // pred_check
          %p396 = pneg %p158
        $region22: #{tpu_custom_call.1} parent=11 // pred_check_branch
          %398 = sbr.rel (%p396) target = $region24
        $region23: #{tpu_custom_call.1} parent=11 // pred_region
          _
        $region24: #{tpu_custom_call.1} parent=11 // pred_fallthru
          _
        // Predicated region
        $region25: #{tpu_custom_call.1} parent=11 // pred_check
          %p399 = pneg %p179
        $region26: #{tpu_custom_call.1} parent=11 // pred_check_branch
          %401 = sbr.rel (%p399) target = $region28
        $region27: #{tpu_custom_call.1} parent=11 // pred_region
          _
        $region28: #{tpu_custom_call.1} parent=11 // pred_fallthru
          _
        // Predicated region
        $region29: #{tpu_custom_call.1} parent=11 // pred_check
          %p402 = pneg %p200
        $region30: #{tpu_custom_call.1} parent=11 // pred_check_branch
          %404 = sbr.rel (%p402) target = $region32
        $region31: #{tpu_custom_call.1} parent=11 // pred_region
          _
        $region32: #{tpu_custom_call.1} parent=11 // pred_fallthru
          _
        // Predicated region
        $region33: #{tpu_custom_call.1} parent=11 // pred_check
          %p405 = pneg %p221
        $region34: #{tpu_custom_call.1} parent=11 // pred_check_branch
          %407 = sbr.rel (%p405) target = $region36
        $region35: #{tpu_custom_call.1} parent=11 // pred_region
          _
        $region36: #{tpu_custom_call.1} parent=11 // pred_fallthru
          _
        // Predicated region
        $region37: #{tpu_custom_call.1} parent=11 // pred_check
          %p408 = pneg %p242
        $region38: #{tpu_custom_call.1} parent=11 // pred_check_branch
          %410 = sbr.rel (%p408) target = $region40
        $region39: #{tpu_custom_call.1} parent=11 // pred_region
          _
        $region40: #{tpu_custom_call.1} parent=11 // pred_fallthru
          _
        // Predicated region
        $region41: #{tpu_custom_call.1} parent=11 // pred_check
          %p411 = pneg %p263
        $region42: #{tpu_custom_call.1} parent=11 // pred_check_branch
          %413 = sbr.rel (%p411) target = $region44
        $region43: #{tpu_custom_call.1} parent=11 // pred_region
          _
        $region44: #{tpu_custom_call.1} parent=11 // pred_fallthru
          _
        // Predicated region
        $region45: #{tpu_custom_call.1} parent=11 // pred_check
          %p414 = pneg %p284
        $region46: #{tpu_custom_call.1} parent=11 // pred_check_branch
          %416 = sbr.rel (%p414) target = $region48
        $region47: #{tpu_custom_call.1} parent=11 // pred_region
          _
        $region48: #{tpu_custom_call.1} parent=11 // pred_fallthru
          _
        // Predicated region
        $region49: #{tpu_custom_call.1} parent=11 // pred_check
          %p417 = pneg %p305
        $region50: #{tpu_custom_call.1} parent=11 // pred_check_branch
          %419 = sbr.rel (%p417) target = $region52
        $region51: #{tpu_custom_call.1} parent=11 // pred_region
          _
        $region52: #{tpu_custom_call.1} parent=11 // pred_fallthru
          _
        // Predicated region
        $region53: #{tpu_custom_call.1} parent=11 // pred_check
          %p420 = pneg %p326
        $region54: #{tpu_custom_call.1} parent=11 // pred_check_branch
          %422 = sbr.rel (%p420) target = $region56
        $region55: #{tpu_custom_call.1} parent=11 // pred_region
          _
        $region56: #{tpu_custom_call.1} parent=11 // pred_fallthru
          _
        // Predicated region
        $region57: #{tpu_custom_call.1} parent=11 // pred_check
          %p423 = pneg %p347
        $region58: #{tpu_custom_call.1} parent=11 // pred_check_branch
          %425 = sbr.rel (%p423) target = $region60
        $region59: #{tpu_custom_call.1} parent=11 // pred_region
          _
        $region60: #{tpu_custom_call.1} parent=11 // pred_fallthru
          _
      $region12: #{tpu_custom_call.1} parent=5 // pred_fallthru
        _
      %p426 = scmp.lt.s32.totalorder %s29, 2
      // Predicated region
      $region61: #{tpu_custom_call.1} parent=5 // pred_check
        %p427 = pneg %p426
      $region62: #{tpu_custom_call.1} parent=5 // pred_check_branch
        %429 = sbr.rel (%p427) target = $region64
      $region63: #{tpu_custom_call.1} parent=5 // pred_region
        // Predicated region
        $region65: #{tpu_custom_call.1} parent=63 // pred_check
          %p430 = pneg %p61
        $region66: #{tpu_custom_call.1} parent=63 // pred_check_branch
          %432 = sbr.rel (%p430) target = $region68
        $region67: #{tpu_custom_call.1} parent=63 // pred_region
          %s433 = sand.u32 %s51, 1
          %s434 = scalar_lea.sflag [#allocation7], %s433
          %s435 = sand.u32 %s51, 1
          %s436 = smul.addr %s435, 8
          %s437 = scalar_lea.vmem [#allocation6], %s436
          %s439 = ssub.s32 128, 128
          %440 = vsyncadd %s434, %s439
          %s441 = smul.addr %s36, 128
          %s442 = scalar_lea.hbm %s0, %s441
          %s444 = sshll.u32 %s437, 4
          %s445 = int_to_ptr.vmem [resolvable:$true] %s444
          %447 = dma.hbm_to_vmem [thread:$0]  %s442, 128, %s445, %s434
        $region68: #{tpu_custom_call.1} parent=63 // pred_fallthru
          _
        // Predicated region
        $region69: #{tpu_custom_call.1} parent=63 // pred_check
          %p448 = pneg %p89
        $region70: #{tpu_custom_call.1} parent=63 // pred_check_branch
          %450 = sbr.rel (%p448) target = $region72
        $region71: #{tpu_custom_call.1} parent=63 // pred_region
          %s451 = sand.u32 %s79, 1
          %s452 = scalar_lea.sflag [#allocation10], %s451
          %s453 = sand.u32 %s79, 1
          %s454 = smul.addr %s453, 8
          %s455 = scalar_lea.vmem [#allocation9], %s454
          %s457 = ssub.s32 128, 128
          %458 = vsyncadd %s452, %s457
          %s459 = sadd.s32 %s37, %s36
          %s460 = smul.addr %s459, 128
          %s461 = scalar_lea.hbm %s1, %s460
          %s463 = sshll.u32 %s455, 4
          %s464 = int_to_ptr.vmem [resolvable:$true] %s463
          %466 = dma.hbm_to_vmem [thread:$0]  %s461, 128, %s464, %s452
        $region72: #{tpu_custom_call.1} parent=63 // pred_fallthru
          _
      $region64: #{tpu_custom_call.1} parent=5 // pred_fallthru
        _
      %p467 = scmp.le.s32.totalorder 1, %s29
      %p468 = scmp.lt.s32.totalorder %s29, 3
      %p469 = pnand %p467, %p468
      %p470 = pneg %p469
      // Predicated region
      $region73: #{tpu_custom_call.1} parent=5 // pred_check
        _
      $region74: #{tpu_custom_call.1} parent=5 // pred_check_branch
        %472 = sbr.rel (%p469) target = $region76
      $region75: #{tpu_custom_call.1} parent=5 // pred_region
        %s473 = ssub.s32 %s29, 1
        %s474 = sand.u32 %s54, 1
        %s475 = scalar_lea.sflag [#allocation7], %s474
        %s476 = sand.u32 %s54, 1
        %s477 = smul.addr %s476, 8
        %s478 = scalar_lea.vmem [#allocation6], %s477
        // Predicated region
        $region77: #{tpu_custom_call.1} parent=75 // pred_check
          %p479 = pneg %p67
        $region78: #{tpu_custom_call.1} parent=75 // pred_check_branch
          %481 = sbr.rel (%p479) target = $region80
        $region79: #{tpu_custom_call.1} parent=75 // pred_region
          %482 = dma.done %s475, 128
        $region80: #{tpu_custom_call.1} parent=75 // pred_fallthru
          _
        %s483 = sand.u32 %s82, 1
        %s484 = scalar_lea.sflag [#allocation10], %s483
        %s485 = sand.u32 %s82, 1
        %s486 = smul.addr %s485, 8
        %s487 = scalar_lea.vmem [#allocation9], %s486
        // Predicated region
        $region81: #{tpu_custom_call.1} parent=75 // pred_check
          %p488 = pneg %p95
        $region82: #{tpu_custom_call.1} parent=75 // pred_check_branch
          %490 = sbr.rel (%p488) target = $region84
        $region83: #{tpu_custom_call.1} parent=75 // pred_region
          %491 = dma.done %s484, 128
        $region84: #{tpu_custom_call.1} parent=75 // pred_fallthru
          _
        %s492 = sand.u32 %s54, 1
        %s493 = scalar_lea.sflag [#allocation7], %s492
        %s494 = sand.u32 %s54, 1
        %s495 = smul.addr %s494, 8
        %s496 = scalar_lea.vmem [#allocation6], %s495
        %p497 = pneg %p67
        %p498 = pneg %p64
        %s499 = sand.u32 %s82, 1
        %s500 = scalar_lea.sflag [#allocation10], %s499
        %s501 = sand.u32 %s82, 1
        %s502 = smul.addr %s501, 8
        %s503 = scalar_lea.vmem [#allocation9], %s502
        %p504 = pneg %p95
        %p505 = pneg %p92
        %p506 = pneg %p116
        %p507 = pneg %p113
        %p508 = pneg %p137
        %p509 = pneg %p134
        %p510 = pneg %p158
        %p511 = pneg %p155
        %p512 = pneg %p179
        %p513 = pneg %p176
        %p514 = pneg %p200
        %p515 = pneg %p197
        %p516 = pneg %p221
        %p517 = pneg %p218
        %p518 = pneg %p242
        %p519 = pneg %p239
        %p520 = pneg %p263
        %p521 = pneg %p260
        %p522 = pneg %p284
        %p523 = pneg %p281
        %p524 = pneg %p305
        %p525 = pneg %p302
        %p526 = pneg %p326
        %p527 = pneg %p323
        %p528 = pneg %p347
        %p529 = pneg %p344
        %p530 = pneg %p375
        %p531 = pneg %p372
        %s532 = sand.u32 %s362, 1
        %s533 = scalar_lea.sflag [#allocation8], %s532
        %s534 = sand.u32 %s362, 1
        %s535 = smul.addr %s534, 8
        %s536 = scalar_lea.vmem [#allocation11], %s535
        %p537 = scmp.eq.s32.totalorder %s39, 0
        // Predicated region
        $region85: #{tpu_custom_call.1} parent=75 // pred_check
          %p538 = pneg %p537
        $region86: #{tpu_custom_call.1} parent=75 // pred_check_branch
          %540 = sbr.rel (%p538) target = $region88
        $region87: #{tpu_custom_call.1} parent=75 // pred_region
          %v541 = vld [vmem:[%s478] sm:$0xff]
          %v542 = vld [vmem:[%s2] sm:$0xff]
          %v543 = vld [vmem:[%s2 + $0x8] sm:$0xff]
          %v544 = vld [vmem:[%s2 + $0x10] sm:$0xff]
          %v545 = vld [vmem:[%s2 + $0x18] sm:$0xff]
          %v546 = vld [vmem:[%s3] sm:$0x1]
          %v548 = vlaneseq
          %v549 = vshrl.u32 %v548, 7
          %v550 = vsub.s32 0, %v549
          %v551 = vrot.slane %v546, %v550
          %vm553 = vcmask 261120
          %v555 = vsel %vm553, %v541, 0
          %557 = vmatprep.subr.mxu0 0.0
          %558 = vmatpush1.msra.mxu0 0.0
          %559 = vmatprep.subr.mxu0 0.0
          %560 = vmatpush1.msra.mxu0 0.0
          %561 = vmatprep.subr.mxu0 0.0
          %562 = vmatpush1.msra.mxu0 0.0
          %563 = vmatprep.subr.mxu0 0.0
          %564 = vmatpush1.msra.mxu0 0.0
          %565 = vmatprep.subr.mxu0 0.0
          %566 = vmatpush1.msra.mxu0 0.0
          %567 = vmatprep.subr.mxu0 0.0
          %568 = vmatpush1.msra.mxu0 0.0
          %569 = vmatprep.subr.mxu0 0.0
          %570 = vmatpush1.msra.mxu0 0.0
          %571 = vmatprep.subr.mxu0 0.0
          %572 = vmatpush1.msra.mxu0 0.0
          %573 = vmatprep.subr.mxu0 0.0
          %574 = vmatpush1.msra.mxu0 0.0
          %575 = vmatprep.subr.mxu0 0.0
          %576 = vmatpush1.msra.mxu0 0.0
          %577 = vmatprep.subr.mxu0 0.0
          %578 = vmatpush1.msra.mxu0 0.0
          %579 = vmatprep.subr.mxu0 0.0
          %580 = vmatpush1.msra.mxu0 0.0
          %581 = vmatprep.subr.mxu0 0.0
          %582 = vmatpush1.msra.mxu0 %v545
          %583 = vmatprep.subr.mxu0 0.0
          %584 = vmatpush1.msra.mxu0 %v544
          %585 = vmatprep.subr.mxu0 0.0
          %586 = vmatpush1.msra.mxu0 %v543
          %587 = vmatprep.subr.mxu0 0.0
          %588 = vmatpush1.msra.mxu0 %v542
          %589 = vmatprep.subr.mxu0 0.0
          %590 = vmatpush2.msra.mxu0 0.0
          %591 = vmatprep.subr.mxu0 0.0
          %592 = vmatpush2.msra.mxu0 0.0
          %593 = vmatprep.subr.mxu0 0.0
          %594 = vmatpush2.msra.mxu0 0.0
          %595 = vmatprep.subr.mxu0 0.0
          %596 = vmatpush2.msra.mxu0 0.0
          %597 = vmatprep.subr.mxu0 0.0
          %598 = vmatpush2.msra.mxu0 0.0
          %599 = vmatprep.subr.mxu0 0.0
          %600 = vmatpush2.msra.mxu0 0.0
          %601 = vmatprep.subr.mxu0 0.0
          %602 = vmatpush2.msra.mxu0 0.0
          %603 = vmatprep.subr.mxu0 0.0
          %604 = vmatpush2.msra.mxu0 0.0
          %605 = vmatprep.subr.mxu0 0.0
          %606 = vmatpush2.msra.mxu0 0.0
          %607 = vmatprep.subr.mxu0 0.0
          %608 = vmatpush2.msra.mxu0 0.0
          %609 = vmatprep.subr.mxu0 0.0
          %610 = vmatpush2.msra.mxu0 0.0
          %611 = vmatprep.subr.mxu0 0.0
          %612 = vmatpush2.msra.mxu0 0.0
          %613 = vmatprep.subr.mxu0 0.0
          %614 = vmatpush2.msra.mxu0 0.0
          %615 = vmatprep.subr.mxu0 0.0
          %616 = vmatpush2.msra.mxu0 0.0
          %617 = vmatprep.subr.mxu0 0.0
          %618 = vmatpush2.msra.mxu0 0.0
          %619 = vmatprep.subr.mxu0 0.0
          %620 = vmatpush2.msra.mxu0 0.0
          %621 = vmatprep.mubr.f32.mxu0 0.0
          %622 = vmatmul.mubr.f32.gmra.mxu0 %v555
          %v623 = vpop.f32.mrf.mxu0
          %v624 = vadd.f32 %v551, %v623
          %v625 = vpop.f32.mrf.mxu0
          %626 = vdwg.mxu0
          %627 = vst.msk [vmem:[#allocation2] sm:$0xff] %vm553, %v624
          %629 = vrot.lane.b32.xlu0 %v624, 96
          %v630 = vpop.permute.xlu0 %629
          %632 = vst.msk [vmem:[#allocation3] sm:$0xff] %vm553, %v630
          %633 = vrot.lane.b32.xlu0 %v624, 64
          %v634 = vpop.permute.xlu0 %633
          %636 = vst.msk [vmem:[#allocation4] sm:$0xff] %vm553, %v634
        $region88: #{tpu_custom_call.1} parent=75 // pred_fallthru
          _
        %s637 = smul.u32 %s39, 8
        %s638 = scalar_lea.vmem %s478, %s637 [#allocation6]
        %v639 = vld [vmem:[%s638] sm:$0xff]
        %s640 = scalar_lea.vmem [#allocation2], %s637
        %v641 = vld [vmem:[%s640] sm:$0xff]
        %v642 = vld [vmem:[%s487] sm:$0xff]
        %vm643 = vcmp.eq.f32.partialorder %v642, 0.0
        %v644 = vsel %vm643, -1e+09, 0.0
        %v645 = vld [vmem:[#allocation3] sm:$0xff]
        %v646 = vld [vmem:[#allocation4] sm:$0xff]
        %vm647 = vcmask 64512
        %v649 = vsel %vm647, %v641, 0
        %v652 = vsel %vm647, %v645, 0
        %654 = vmatprep.subr.mxu0 0.0
        %655 = vmatpush1.xpose.msra.mxu0 0.0
        %656 = vmatprep.subr.mxu0 0.0
        %657 = vmatpush1.xpose.msra.mxu0 0.0
        %658 = vmatprep.subr.mxu0 0.0
        %659 = vmatpush1.xpose.msra.mxu0 0.0
        %660 = vmatprep.subr.mxu0 0.0
        %661 = vmatpush1.xpose.msra.mxu0 0.0
        %662 = vmatprep.subr.mxu0 0.0
        %663 = vmatpush1.xpose.msra.mxu0 0.0
        %664 = vmatprep.subr.mxu0 0.0
        %665 = vmatpush1.xpose.msra.mxu0 0.0
        %666 = vmatprep.subr.mxu0 0.0
        %667 = vmatpush1.xpose.msra.mxu0 0.0
        %668 = vmatprep.subr.mxu0 0.0
        %669 = vmatpush1.xpose.msra.mxu0 0.0
        %670 = vmatprep.subr.mxu0 0.0
        %671 = vmatpush1.xpose.msra.mxu0 0.0
        %672 = vmatprep.subr.mxu0 0.0
        %673 = vmatpush1.xpose.msra.mxu0 0.0
        %674 = vmatprep.subr.mxu0 0.0
        %675 = vmatpush1.xpose.msra.mxu0 0.0
        %676 = vmatprep.subr.mxu0 0.0
        %677 = vmatpush1.xpose.msra.mxu0 0.0
        %678 = vmatprep.subr.mxu0 0.0
        %679 = vmatpush1.xpose.msra.mxu0 0.0
        %680 = vmatprep.subr.mxu0 0.0
        %681 = vmatpush1.xpose.msra.mxu0 0.0
        %682 = vmatprep.subr.mxu0 0.0
        %683 = vmatpush1.xpose.msra.mxu0 0.0
        %684 = vmatprep.subr.mxu0 0.0
        %685 = vmatpush1.xpose.msra.mxu0 %v652
        %686 = vmatprep.subr.mxu0 0.0
        %687 = vmatpush2.xpose.msra.mxu0 0.0
        %688 = vmatprep.subr.mxu0 0.0
        %689 = vmatpush2.xpose.msra.mxu0 0.0
        %690 = vmatprep.subr.mxu0 0.0
        %691 = vmatpush2.xpose.msra.mxu0 0.0
        %692 = vmatprep.subr.mxu0 0.0
        %693 = vmatpush2.xpose.msra.mxu0 0.0
        %694 = vmatprep.subr.mxu0 0.0
        %695 = vmatpush2.xpose.msra.mxu0 0.0
        %696 = vmatprep.subr.mxu0 0.0
        %697 = vmatpush2.xpose.msra.mxu0 0.0
        %698 = vmatprep.subr.mxu0 0.0
        %699 = vmatpush2.xpose.msra.mxu0 0.0
        %700 = vmatprep.subr.mxu0 0.0
        %701 = vmatpush2.xpose.msra.mxu0 0.0
        %702 = vmatprep.subr.mxu0 0.0
        %703 = vmatpush2.xpose.msra.mxu0 0.0
        %704 = vmatprep.subr.mxu0 0.0
        %705 = vmatpush2.xpose.msra.mxu0 0.0
        %706 = vmatprep.subr.mxu0 0.0
        %707 = vmatpush2.xpose.msra.mxu0 0.0
        %708 = vmatprep.subr.mxu0 0.0
        %709 = vmatpush2.xpose.msra.mxu0 0.0
        %710 = vmatprep.subr.mxu0 0.0
        %711 = vmatpush2.xpose.msra.mxu0 0.0
        %712 = vmatprep.subr.mxu0 0.0
        %713 = vmatpush2.xpose.msra.mxu0 0.0
        %714 = vmatprep.subr.mxu0 0.0
        %715 = vmatpush2.xpose.msra.mxu0 0.0
        %716 = vmatprep.subr.mxu0 0.0
        %717 = vmatpush2.xpose.msra.mxu0 0.0
        %718 = vmatprep.mubr.f32.mxu0 0.0
        %719 = vmatmul.mubr.f32.gmra.mxu0 %v649
        %v720 = vpop.f32.mrf.mxu0
        %v721 = vadd.f32 %v644, %v720
        %v722 = vpop.f32.mrf.mxu0
        %723 = vdwg.mxu0
        %v724 = vsel %vm647, %v721, -inf
        %725 = vmax.xlane.f32.xlu0 %v724
        %v726 = vpop.xlane.xlu0 %725
        %v727 = vsub.f32 %v721, %v726
        %v728 = vmul.f32 %v727, 1.442695
        %v729 = vpow.pop %v728
        %v730 = vsel %vm647, %v729, 0.0
        %731 = vadd.xlane.f32.xlu0 %v730
        %v732 = vpop.xlane.xlu0 %731
        %v733 = vrcp.pop %v732
        %v734 = vmul.f32 %v729, %v733
        %v736 = vsel %vm647, %v734, 0
        %738 = vmatprep.subr.mxu0 0.0
        %739 = vmatpush1.msra.mxu0 0.0
        %740 = vmatprep.subr.mxu0 0.0
        %741 = vmatpush1.msra.mxu0 0.0
        %742 = vmatprep.subr.mxu0 0.0
        %743 = vmatpush1.msra.mxu0 0.0
        %744 = vmatprep.subr.mxu0 0.0
        %745 = vmatpush1.msra.mxu0 0.0
        %746 = vmatprep.subr.mxu0 0.0
        %747 = vmatpush1.msra.mxu0 0.0
        %748 = vmatprep.subr.mxu0 0.0
        %749 = vmatpush1.msra.mxu0 0.0
        %750 = vmatprep.subr.mxu0 0.0
        %751 = vmatpush1.msra.mxu0 0.0
        %752 = vmatprep.subr.mxu0 0.0
        %753 = vmatpush1.msra.mxu0 0.0
        %754 = vmatprep.subr.mxu0 0.0
        %755 = vmatpush1.msra.mxu0 0.0
        %756 = vmatprep.subr.mxu0 0.0
        %757 = vmatpush1.msra.mxu0 0.0
        %758 = vmatprep.subr.mxu0 0.0
        %759 = vmatpush1.msra.mxu0 0.0
        %760 = vmatprep.subr.mxu0 0.0
        %761 = vmatpush1.msra.mxu0 0.0
        %762 = vmatprep.subr.mxu0 0.0
        %763 = vmatpush1.msra.mxu0 0.0
        %764 = vmatprep.subr.mxu0 0.0
        %765 = vmatpush1.msra.mxu0 0.0
        %766 = vmatprep.subr.mxu0 0.0
        %767 = vmatpush1.msra.mxu0 0.0
        %768 = vmatprep.subr.mxu0 0.0
        %769 = vmatpush1.msra.mxu0 %v646
        %770 = vmatprep.subr.mxu0 0.0
        %771 = vmatpush2.msra.mxu0 0.0
        %772 = vmatprep.subr.mxu0 0.0
        %773 = vmatpush2.msra.mxu0 0.0
        %774 = vmatprep.subr.mxu0 0.0
        %775 = vmatpush2.msra.mxu0 0.0
        %776 = vmatprep.subr.mxu0 0.0
        %777 = vmatpush2.msra.mxu0 0.0
        %778 = vmatprep.subr.mxu0 0.0
        %779 = vmatpush2.msra.mxu0 0.0
        %780 = vmatprep.subr.mxu0 0.0
        %781 = vmatpush2.msra.mxu0 0.0
        %782 = vmatprep.subr.mxu0 0.0
        %783 = vmatpush2.msra.mxu0 0.0
        %784 = vmatprep.subr.mxu0 0.0
        %785 = vmatpush2.msra.mxu0 0.0
        %786 = vmatprep.subr.mxu0 0.0
        %787 = vmatpush2.msra.mxu0 0.0
        %788 = vmatprep.subr.mxu0 0.0
        %789 = vmatpush2.msra.mxu0 0.0
        %790 = vmatprep.subr.mxu0 0.0
        %791 = vmatpush2.msra.mxu0 0.0
        %792 = vmatprep.subr.mxu0 0.0
        %793 = vmatpush2.msra.mxu0 0.0
        %794 = vmatprep.subr.mxu0 0.0
        %795 = vmatpush2.msra.mxu0 0.0
        %796 = vmatprep.subr.mxu0 0.0
        %797 = vmatpush2.msra.mxu0 0.0
        %798 = vmatprep.subr.mxu0 0.0
        %799 = vmatpush2.msra.mxu0 0.0
        %800 = vmatprep.subr.mxu0 0.0
        %801 = vmatpush2.msra.mxu0 0.0
        %802 = vmatprep.mubr.f32.mxu0 0.0
        %803 = vmatmul.mubr.f32.gmra.mxu0 %v736
        %v804 = vpop.f32.mrf.mxu0
        %v805 = vadd.f32 0.0, %v804
        %v806 = vpop.f32.mrf.mxu0
        %807 = vdwg.mxu0
        %808 = vst.msk [vmem:[#allocation5] sm:$0xff] %vm647, %v805
        %v809 = vld [vmem:[#allocation3] sm:$0xff]
        %v810 = vld [vmem:[#allocation4] sm:$0xff]
        %811 = vrot.lane.b32.xlu0 %v641, 120
        %v812 = vpop.permute.xlu0 %811
        %814 = vrot.lane.b32.xlu0 %v809, 120
        %v815 = vpop.permute.xlu0 %814
        %v816 = vsel %vm647, %v812, 0
        %v818 = vsel %vm647, %v815, 0
        %820 = vmatprep.subr.mxu0 0.0
        %821 = vmatpush1.xpose.msra.mxu0 0.0
        %822 = vmatprep.subr.mxu0 0.0
        %823 = vmatpush1.xpose.msra.mxu0 0.0
        %824 = vmatprep.subr.mxu0 0.0
        %825 = vmatpush1.xpose.msra.mxu0 0.0
        %826 = vmatprep.subr.mxu0 0.0
        %827 = vmatpush1.xpose.msra.mxu0 0.0
        %828 = vmatprep.subr.mxu0 0.0
        %829 = vmatpush1.xpose.msra.mxu0 0.0
        %830 = vmatprep.subr.mxu0 0.0
        %831 = vmatpush1.xpose.msra.mxu0 0.0
        %832 = vmatprep.subr.mxu0 0.0
        %833 = vmatpush1.xpose.msra.mxu0 0.0
        %834 = vmatprep.subr.mxu0 0.0
        %835 = vmatpush1.xpose.msra.mxu0 0.0
        %836 = vmatprep.subr.mxu0 0.0
        %837 = vmatpush1.xpose.msra.mxu0 0.0
        %838 = vmatprep.subr.mxu0 0.0
        %839 = vmatpush1.xpose.msra.mxu0 0.0
        %840 = vmatprep.subr.mxu0 0.0
        %841 = vmatpush1.xpose.msra.mxu0 0.0
        %842 = vmatprep.subr.mxu0 0.0
        %843 = vmatpush1.xpose.msra.mxu0 0.0
        %844 = vmatprep.subr.mxu0 0.0
        %845 = vmatpush1.xpose.msra.mxu0 0.0
        %846 = vmatprep.subr.mxu0 0.0
        %847 = vmatpush1.xpose.msra.mxu0 0.0
        %848 = vmatprep.subr.mxu0 0.0
        %849 = vmatpush1.xpose.msra.mxu0 0.0
        %850 = vmatprep.subr.mxu0 0.0
        %851 = vmatpush1.xpose.msra.mxu0 %v818
        %852 = vmatprep.subr.mxu0 0.0
        %853 = vmatpush2.xpose.msra.mxu0 0.0
        %854 = vmatprep.subr.mxu0 0.0
        %855 = vmatpush2.xpose.msra.mxu0 0.0
        %856 = vmatprep.subr.mxu0 0.0
        %857 = vmatpush2.xpose.msra.mxu0 0.0
        %858 = vmatprep.subr.mxu0 0.0
        %859 = vmatpush2.xpose.msra.mxu0 0.0
        %860 = vmatprep.subr.mxu0 0.0
        %861 = vmatpush2.xpose.msra.mxu0 0.0
        %862 = vmatprep.subr.mxu0 0.0
        %863 = vmatpush2.xpose.msra.mxu0 0.0
        %864 = vmatprep.subr.mxu0 0.0
        %865 = vmatpush2.xpose.msra.mxu0 0.0
        %866 = vmatprep.subr.mxu0 0.0
        %867 = vmatpush2.xpose.msra.mxu0 0.0
        %868 = vmatprep.subr.mxu0 0.0
        %869 = vmatpush2.xpose.msra.mxu0 0.0
        %870 = vmatprep.subr.mxu0 0.0
        %871 = vmatpush2.xpose.msra.mxu0 0.0
        %872 = vmatprep.subr.mxu0 0.0
        %873 = vmatpush2.xpose.msra.mxu0 0.0
        %874 = vmatprep.subr.mxu0 0.0
        %875 = vmatpush2.xpose.msra.mxu0 0.0
        %876 = vmatprep.subr.mxu0 0.0
        %877 = vmatpush2.xpose.msra.mxu0 0.0
        %878 = vmatprep.subr.mxu0 0.0
        %879 = vmatpush2.xpose.msra.mxu0 0.0
        %880 = vmatprep.subr.mxu0 0.0
        %881 = vmatpush2.xpose.msra.mxu0 0.0
        %882 = vmatprep.subr.mxu0 0.0
        %883 = vmatpush2.xpose.msra.mxu0 0.0
        %884 = vmatprep.mubr.f32.mxu0 0.0
        %885 = vmatmul.mubr.f32.gmra.mxu0 %v816
        %v886 = vpop.f32.mrf.mxu0
        %v887 = vadd.f32 %v644, %v886
        %v888 = vpop.f32.mrf.mxu0
        %889 = vdwg.mxu0
        %v890 = vsel %vm647, %v887, -inf
        %891 = vmax.xlane.f32.xlu0 %v890
        %v892 = vpop.xlane.xlu0 %891
        %v893 = vsub.f32 %v887, %v892
        %v894 = vmul.f32 %v893, 1.442695
        %v895 = vpow.pop %v894
        %v896 = vsel %vm647, %v895, 0.0
        %897 = vadd.xlane.f32.xlu0 %v896
        %v898 = vpop.xlane.xlu0 %897
        %v899 = vrcp.pop %v898
        %v900 = vmul.f32 %v895, %v899
        %902 = vrot.lane.b32.xlu0 %v810, 120
        %v903 = vpop.permute.xlu0 %902
        %v906 = vsel %vm647, %v900, 0
        %908 = vmatprep.subr.mxu0 0.0
        %909 = vmatpush1.msra.mxu0 0.0
        %910 = vmatprep.subr.mxu0 0.0
        %911 = vmatpush1.msra.mxu0 0.0
        %912 = vmatprep.subr.mxu0 0.0
        %913 = vmatpush1.msra.mxu0 0.0
        %914 = vmatprep.subr.mxu0 0.0
        %915 = vmatpush1.msra.mxu0 0.0
        %916 = vmatprep.subr.mxu0 0.0
        %917 = vmatpush1.msra.mxu0 0.0
        %918 = vmatprep.subr.mxu0 0.0
        %919 = vmatpush1.msra.mxu0 0.0
        %920 = vmatprep.subr.mxu0 0.0
        %921 = vmatpush1.msra.mxu0 0.0
        %922 = vmatprep.subr.mxu0 0.0
        %923 = vmatpush1.msra.mxu0 0.0
        %924 = vmatprep.subr.mxu0 0.0
        %925 = vmatpush1.msra.mxu0 0.0
        %926 = vmatprep.subr.mxu0 0.0
        %927 = vmatpush1.msra.mxu0 0.0
        %928 = vmatprep.subr.mxu0 0.0
        %929 = vmatpush1.msra.mxu0 0.0
        %930 = vmatprep.subr.mxu0 0.0
        %931 = vmatpush1.msra.mxu0 0.0
        %932 = vmatprep.subr.mxu0 0.0
        %933 = vmatpush1.msra.mxu0 0.0
        %934 = vmatprep.subr.mxu0 0.0
        %935 = vmatpush1.msra.mxu0 0.0
        %936 = vmatprep.subr.mxu0 0.0
        %937 = vmatpush1.msra.mxu0 0.0
        %938 = vmatprep.subr.mxu0 0.0
        %939 = vmatpush1.msra.mxu0 %v903
        %940 = vmatprep.subr.mxu0 0.0
        %941 = vmatpush2.msra.mxu0 0.0
        %942 = vmatprep.subr.mxu0 0.0
        %943 = vmatpush2.msra.mxu0 0.0
        %944 = vmatprep.subr.mxu0 0.0
        %945 = vmatpush2.msra.mxu0 0.0
        %946 = vmatprep.subr.mxu0 0.0
        %947 = vmatpush2.msra.mxu0 0.0
        %948 = vmatprep.subr.mxu0 0.0
        %949 = vmatpush2.msra.mxu0 0.0
        %950 = vmatprep.subr.mxu0 0.0
        %951 = vmatpush2.msra.mxu0 0.0
        %952 = vmatprep.subr.mxu0 0.0
        %953 = vmatpush2.msra.mxu0 0.0
        %954 = vmatprep.subr.mxu0 0.0
        %955 = vmatpush2.msra.mxu0 0.0
        %956 = vmatprep.subr.mxu0 0.0
        %957 = vmatpush2.msra.mxu0 0.0
        %958 = vmatprep.subr.mxu0 0.0
        %959 = vmatpush2.msra.mxu0 0.0
        %960 = vmatprep.subr.mxu0 0.0
        %961 = vmatpush2.msra.mxu0 0.0
        %962 = vmatprep.subr.mxu0 0.0
        %963 = vmatpush2.msra.mxu0 0.0
        %964 = vmatprep.subr.mxu0 0.0
        %965 = vmatpush2.msra.mxu0 0.0
        %966 = vmatprep.subr.mxu0 0.0
        %967 = vmatpush2.msra.mxu0 0.0
        %968 = vmatprep.subr.mxu0 0.0
        %969 = vmatpush2.msra.mxu0 0.0
        %970 = vmatprep.subr.mxu0 0.0
        %971 = vmatpush2.msra.mxu0 0.0
        %972 = vmatprep.mubr.f32.mxu0 0.0
        %973 = vmatmul.mubr.f32.gmra.mxu0 %v906
        %v974 = vpop.f32.mrf.mxu0
        %v975 = vadd.f32 0.0, %v974
        %v976 = vpop.f32.mrf.mxu0
        %977 = vdwg.mxu0
        %979 = vrot.lane.b32.xlu0 %v975, 8
        %v980 = vpop.permute.xlu0 %979
        %vm982 = vcmask 130112
        %983 = vst.msk [vmem:[#allocation5] sm:$0xff] %vm982, %v980
        %v984 = vld [vmem:[#allocation3] sm:$0xff]
        %v985 = vld [vmem:[#allocation4] sm:$0xff]
        %986 = vrot.lane.b32.xlu0 %v641, 112
        %v987 = vpop.permute.xlu0 %986
        %989 = vrot.lane.b32.xlu0 %v984, 112
        %v990 = vpop.permute.xlu0 %989
        %v991 = vsel %vm647, %v987, 0
        %v993 = vsel %vm647, %v990, 0
        %995 = vmatprep.subr.mxu0 0.0
        %996 = vmatpush1.xpose.msra.mxu0 0.0
        %997 = vmatprep.subr.mxu0 0.0
        %998 = vmatpush1.xpose.msra.mxu0 0.0
        %999 = vmatprep.subr.mxu0 0.0
        %1000 = vmatpush1.xpose.msra.mxu0 0.0
        %1001 = vmatprep.subr.mxu0 0.0
        %1002 = vmatpush1.xpose.msra.mxu0 0.0
        %1003 = vmatprep.subr.mxu0 0.0
        %1004 = vmatpush1.xpose.msra.mxu0 0.0
        %1005 = vmatprep.subr.mxu0 0.0
        %1006 = vmatpush1.xpose.msra.mxu0 0.0
        %1007 = vmatprep.subr.mxu0 0.0
        %1008 = vmatpush1.xpose.msra.mxu0 0.0
        %1009 = vmatprep.subr.mxu0 0.0
        %1010 = vmatpush1.xpose.msra.mxu0 0.0
        %1011 = vmatprep.subr.mxu0 0.0
        %1012 = vmatpush1.xpose.msra.mxu0 0.0
        %1013 = vmatprep.subr.mxu0 0.0
        %1014 = vmatpush1.xpose.msra.mxu0 0.0
        %1015 = vmatprep.subr.mxu0 0.0
        %1016 = vmatpush1.xpose.msra.mxu0 0.0
        %1017 = vmatprep.subr.mxu0 0.0
        %1018 = vmatpush1.xpose.msra.mxu0 0.0
        %1019 = vmatprep.subr.mxu0 0.0
        %1020 = vmatpush1.xpose.msra.mxu0 0.0
        %1021 = vmatprep.subr.mxu0 0.0
        %1022 = vmatpush1.xpose.msra.mxu0 0.0
        %1023 = vmatprep.subr.mxu0 0.0
        %1024 = vmatpush1.xpose.msra.mxu0 0.0
        %1025 = vmatprep.subr.mxu0 0.0
        %1026 = vmatpush1.xpose.msra.mxu0 %v993
        %1027 = vmatprep.subr.mxu0 0.0
        %1028 = vmatpush2.xpose.msra.mxu0 0.0
        %1029 = vmatprep.subr.mxu0 0.0
        %1030 = vmatpush2.xpose.msra.mxu0 0.0
        %1031 = vmatprep.subr.mxu0 0.0
        %1032 = vmatpush2.xpose.msra.mxu0 0.0
        %1033 = vmatprep.subr.mxu0 0.0
        %1034 = vmatpush2.xpose.msra.mxu0 0.0
        %1035 = vmatprep.subr.mxu0 0.0
        %1036 = vmatpush2.xpose.msra.mxu0 0.0
        %1037 = vmatprep.subr.mxu0 0.0
        %1038 = vmatpush2.xpose.msra.mxu0 0.0
        %1039 = vmatprep.subr.mxu0 0.0
        %1040 = vmatpush2.xpose.msra.mxu0 0.0
        %1041 = vmatprep.subr.mxu0 0.0
        %1042 = vmatpush2.xpose.msra.mxu0 0.0
        %1043 = vmatprep.subr.mxu0 0.0
        %1044 = vmatpush2.xpose.msra.mxu0 0.0
        %1045 = vmatprep.subr.mxu0 0.0
        %1046 = vmatpush2.xpose.msra.mxu0 0.0
        %1047 = vmatprep.subr.mxu0 0.0
        %1048 = vmatpush2.xpose.msra.mxu0 0.0
        %1049 = vmatprep.subr.mxu0 0.0
        %1050 = vmatpush2.xpose.msra.mxu0 0.0
        %1051 = vmatprep.subr.mxu0 0.0
        %1052 = vmatpush2.xpose.msra.mxu0 0.0
        %1053 = vmatprep.subr.mxu0 0.0
        %1054 = vmatpush2.xpose.msra.mxu0 0.0
        %1055 = vmatprep.subr.mxu0 0.0
        %1056 = vmatpush2.xpose.msra.mxu0 0.0
        %1057 = vmatprep.subr.mxu0 0.0
        %1058 = vmatpush2.xpose.msra.mxu0 0.0
        %1059 = vmatprep.mubr.f32.mxu0 0.0
        %1060 = vmatmul.mubr.f32.gmra.mxu0 %v991
        %v1061 = vpop.f32.mrf.mxu0
        %v1062 = vadd.f32 %v644, %v1061
        %v1063 = vpop.f32.mrf.mxu0
        %1064 = vdwg.mxu0
        %v1065 = vsel %vm647, %v1062, -inf
        %1066 = vmax.xlane.f32.xlu0 %v1065
        %v1067 = vpop.xlane.xlu0 %1066
        %v1068 = vsub.f32 %v1062, %v1067
        %v1069 = vmul.f32 %v1068, 1.442695
        %v1070 = vpow.pop %v1069
        %v1071 = vsel %vm647, %v1070, 0.0
        %1072 = vadd.xlane.f32.xlu0 %v1071
        %v1073 = vpop.xlane.xlu0 %1072
        %v1074 = vrcp.pop %v1073
        %v1075 = vmul.f32 %v1070, %v1074
        %1077 = vrot.lane.b32.xlu0 %v985, 112
        %v1078 = vpop.permute.xlu0 %1077
        %v1081 = vsel %vm647, %v1075, 0
        %1083 = vmatprep.subr.mxu0 0.0
        %1084 = vmatpush1.msra.mxu0 0.0
        %1085 = vmatprep.subr.mxu0 0.0
        %1086 = vmatpush1.msra.mxu0 0.0
        %1087 = vmatprep.subr.mxu0 0.0
        %1088 = vmatpush1.msra.mxu0 0.0
        %1089 = vmatprep.subr.mxu0 0.0
        %1090 = vmatpush1.msra.mxu0 0.0
        %1091 = vmatprep.subr.mxu0 0.0
        %1092 = vmatpush1.msra.mxu0 0.0
        %1093 = vmatprep.subr.mxu0 0.0
        %1094 = vmatpush1.msra.mxu0 0.0
        %1095 = vmatprep.subr.mxu0 0.0
        %1096 = vmatpush1.msra.mxu0 0.0
        %1097 = vmatprep.subr.mxu0 0.0
        %1098 = vmatpush1.msra.mxu0 0.0
        %1099 = vmatprep.subr.mxu0 0.0
        %1100 = vmatpush1.msra.mxu0 0.0
        %1101 = vmatprep.subr.mxu0 0.0
        %1102 = vmatpush1.msra.mxu0 0.0
        %1103 = vmatprep.subr.mxu0 0.0
        %1104 = vmatpush1.msra.mxu0 0.0
        %1105 = vmatprep.subr.mxu0 0.0
        %1106 = vmatpush1.msra.mxu0 0.0
        %1107 = vmatprep.subr.mxu0 0.0
        %1108 = vmatpush1.msra.mxu0 0.0
        %1109 = vmatprep.subr.mxu0 0.0
        %1110 = vmatpush1.msra.mxu0 0.0
        %1111 = vmatprep.subr.mxu0 0.0
        %1112 = vmatpush1.msra.mxu0 0.0
        %1113 = vmatprep.subr.mxu0 0.0
        %1114 = vmatpush1.msra.mxu0 %v1078
        %1115 = vmatprep.subr.mxu0 0.0
        %1116 = vmatpush2.msra.mxu0 0.0
        %1117 = vmatprep.subr.mxu0 0.0
        %1118 = vmatpush2.msra.mxu0 0.0
        %1119 = vmatprep.subr.mxu0 0.0
        %1120 = vmatpush2.msra.mxu0 0.0
        %1121 = vmatprep.subr.mxu0 0.0
        %1122 = vmatpush2.msra.mxu0 0.0
        %1123 = vmatprep.subr.mxu0 0.0
        %1124 = vmatpush2.msra.mxu0 0.0
        %1125 = vmatprep.subr.mxu0 0.0
        %1126 = vmatpush2.msra.mxu0 0.0
        %1127 = vmatprep.subr.mxu0 0.0
        %1128 = vmatpush2.msra.mxu0 0.0
        %1129 = vmatprep.subr.mxu0 0.0
        %1130 = vmatpush2.msra.mxu0 0.0
        %1131 = vmatprep.subr.mxu0 0.0
        %1132 = vmatpush2.msra.mxu0 0.0
        %1133 = vmatprep.subr.mxu0 0.0
        %1134 = vmatpush2.msra.mxu0 0.0
        %1135 = vmatprep.subr.mxu0 0.0
        %1136 = vmatpush2.msra.mxu0 0.0
        %1137 = vmatprep.subr.mxu0 0.0
        %1138 = vmatpush2.msra.mxu0 0.0
        %1139 = vmatprep.subr.mxu0 0.0
        %1140 = vmatpush2.msra.mxu0 0.0
        %1141 = vmatprep.subr.mxu0 0.0
        %1142 = vmatpush2.msra.mxu0 0.0
        %1143 = vmatprep.subr.mxu0 0.0
        %1144 = vmatpush2.msra.mxu0 0.0
        %1145 = vmatprep.subr.mxu0 0.0
        %1146 = vmatpush2.msra.mxu0 0.0
        %1147 = vmatprep.mubr.f32.mxu0 0.0
        %1148 = vmatmul.mubr.f32.gmra.mxu0 %v1081
        %v1149 = vpop.f32.mrf.mxu0
        %v1150 = vadd.f32 0.0, %v1149
        %v1151 = vpop.f32.mrf.mxu0
        %1152 = vdwg.mxu0
        %1154 = vrot.lane.b32.xlu0 %v1150, 16
        %v1155 = vpop.permute.xlu0 %1154
        %vm1157 = vcmask 195712
        %1158 = vst.msk [vmem:[#allocation5] sm:$0xff] %vm1157, %v1155
        %v1159 = vld [vmem:[#allocation3] sm:$0xff]
        %v1160 = vld [vmem:[#allocation4] sm:$0xff]
        %1161 = vrot.lane.b32.xlu0 %v641, 104
        %v1162 = vpop.permute.xlu0 %1161
        %1164 = vrot.lane.b32.xlu0 %v1159, 104
        %v1165 = vpop.permute.xlu0 %1164
        %v1166 = vsel %vm647, %v1162, 0
        %v1168 = vsel %vm647, %v1165, 0
        %1170 = vmatprep.subr.mxu0 0.0
        %1171 = vmatpush1.xpose.msra.mxu0 0.0
        %1172 = vmatprep.subr.mxu0 0.0
        %1173 = vmatpush1.xpose.msra.mxu0 0.0
        %1174 = vmatprep.subr.mxu0 0.0
        %1175 = vmatpush1.xpose.msra.mxu0 0.0
        %1176 = vmatprep.subr.mxu0 0.0
        %1177 = vmatpush1.xpose.msra.mxu0 0.0
        %1178 = vmatprep.subr.mxu0 0.0
        %1179 = vmatpush1.xpose.msra.mxu0 0.0
        %1180 = vmatprep.subr.mxu0 0.0
        %1181 = vmatpush1.xpose.msra.mxu0 0.0
        %1182 = vmatprep.subr.mxu0 0.0
        %1183 = vmatpush1.xpose.msra.mxu0 0.0
        %1184 = vmatprep.subr.mxu0 0.0
        %1185 = vmatpush1.xpose.msra.mxu0 0.0
        %1186 = vmatprep.subr.mxu0 0.0
        %1187 = vmatpush1.xpose.msra.mxu0 0.0
        %1188 = vmatprep.subr.mxu0 0.0
        %1189 = vmatpush1.xpose.msra.mxu0 0.0
        %1190 = vmatprep.subr.mxu0 0.0
        %1191 = vmatpush1.xpose.msra.mxu0 0.0
        %1192 = vmatprep.subr.mxu0 0.0
        %1193 = vmatpush1.xpose.msra.mxu0 0.0
        %1194 = vmatprep.subr.mxu0 0.0
        %1195 = vmatpush1.xpose.msra.mxu0 0.0
        %1196 = vmatprep.subr.mxu0 0.0
        %1197 = vmatpush1.xpose.msra.mxu0 0.0
        %1198 = vmatprep.subr.mxu0 0.0
        %1199 = vmatpush1.xpose.msra.mxu0 0.0
        %1200 = vmatprep.subr.mxu0 0.0
        %1201 = vmatpush1.xpose.msra.mxu0 %v1168
        %1202 = vmatprep.subr.mxu0 0.0
        %1203 = vmatpush2.xpose.msra.mxu0 0.0
        %1204 = vmatprep.subr.mxu0 0.0
        %1205 = vmatpush2.xpose.msra.mxu0 0.0
        %1206 = vmatprep.subr.mxu0 0.0
        %1207 = vmatpush2.xpose.msra.mxu0 0.0
        %1208 = vmatprep.subr.mxu0 0.0
        %1209 = vmatpush2.xpose.msra.mxu0 0.0
        %1210 = vmatprep.subr.mxu0 0.0
        %1211 = vmatpush2.xpose.msra.mxu0 0.0
        %1212 = vmatprep.subr.mxu0 0.0
        %1213 = vmatpush2.xpose.msra.mxu0 0.0
        %1214 = vmatprep.subr.mxu0 0.0
        %1215 = vmatpush2.xpose.msra.mxu0 0.0
        %1216 = vmatprep.subr.mxu0 0.0
        %1217 = vmatpush2.xpose.msra.mxu0 0.0
        %1218 = vmatprep.subr.mxu0 0.0
        %1219 = vmatpush2.xpose.msra.mxu0 0.0
        %1220 = vmatprep.subr.mxu0 0.0
        %1221 = vmatpush2.xpose.msra.mxu0 0.0
        %1222 = vmatprep.subr.mxu0 0.0
        %1223 = vmatpush2.xpose.msra.mxu0 0.0
        %1224 = vmatprep.subr.mxu0 0.0
        %1225 = vmatpush2.xpose.msra.mxu0 0.0
        %1226 = vmatprep.subr.mxu0 0.0
        %1227 = vmatpush2.xpose.msra.mxu0 0.0
        %1228 = vmatprep.subr.mxu0 0.0
        %1229 = vmatpush2.xpose.msra.mxu0 0.0
        %1230 = vmatprep.subr.mxu0 0.0
        %1231 = vmatpush2.xpose.msra.mxu0 0.0
        %1232 = vmatprep.subr.mxu0 0.0
        %1233 = vmatpush2.xpose.msra.mxu0 0.0
        %1234 = vmatprep.mubr.f32.mxu0 0.0
        %1235 = vmatmul.mubr.f32.gmra.mxu0 %v1166
        %v1236 = vpop.f32.mrf.mxu0
        %v1237 = vadd.f32 %v644, %v1236
        %v1238 = vpop.f32.mrf.mxu0
        %1239 = vdwg.mxu0
        %v1240 = vsel %vm647, %v1237, -inf
        %1241 = vmax.xlane.f32.xlu0 %v1240
        %v1242 = vpop.xlane.xlu0 %1241
        %v1243 = vsub.f32 %v1237, %v1242
        %v1244 = vmul.f32 %v1243, 1.442695
        %v1245 = vpow.pop %v1244
        %v1246 = vsel %vm647, %v1245, 0.0
        %1247 = vadd.xlane.f32.xlu0 %v1246
        %v1248 = vpop.xlane.xlu0 %1247
        %v1249 = vrcp.pop %v1248
        %v1250 = vmul.f32 %v1245, %v1249
        %1252 = vrot.lane.b32.xlu0 %v1160, 104
        %v1253 = vpop.permute.xlu0 %1252
        %v1256 = vsel %vm647, %v1250, 0
        %1258 = vmatprep.subr.mxu0 0.0
        %1259 = vmatpush1.msra.mxu0 0.0
        %1260 = vmatprep.subr.mxu0 0.0
        %1261 = vmatpush1.msra.mxu0 0.0
        %1262 = vmatprep.subr.mxu0 0.0
        %1263 = vmatpush1.msra.mxu0 0.0
        %1264 = vmatprep.subr.mxu0 0.0
        %1265 = vmatpush1.msra.mxu0 0.0
        %1266 = vmatprep.subr.mxu0 0.0
        %1267 = vmatpush1.msra.mxu0 0.0
        %1268 = vmatprep.subr.mxu0 0.0
        %1269 = vmatpush1.msra.mxu0 0.0
        %1270 = vmatprep.subr.mxu0 0.0
        %1271 = vmatpush1.msra.mxu0 0.0
        %1272 = vmatprep.subr.mxu0 0.0
        %1273 = vmatpush1.msra.mxu0 0.0
        %1274 = vmatprep.subr.mxu0 0.0
        %1275 = vmatpush1.msra.mxu0 0.0
        %1276 = vmatprep.subr.mxu0 0.0
        %1277 = vmatpush1.msra.mxu0 0.0
        %1278 = vmatprep.subr.mxu0 0.0
        %1279 = vmatpush1.msra.mxu0 0.0
        %1280 = vmatprep.subr.mxu0 0.0
        %1281 = vmatpush1.msra.mxu0 0.0
        %1282 = vmatprep.subr.mxu0 0.0
        %1283 = vmatpush1.msra.mxu0 0.0
        %1284 = vmatprep.subr.mxu0 0.0
        %1285 = vmatpush1.msra.mxu0 0.0
        %1286 = vmatprep.subr.mxu0 0.0
        %1287 = vmatpush1.msra.mxu0 0.0
        %1288 = vmatprep.subr.mxu0 0.0
        %1289 = vmatpush1.msra.mxu0 %v1253
        %1290 = vmatprep.subr.mxu0 0.0
        %1291 = vmatpush2.msra.mxu0 0.0
        %1292 = vmatprep.subr.mxu0 0.0
        %1293 = vmatpush2.msra.mxu0 0.0
        %1294 = vmatprep.subr.mxu0 0.0
        %1295 = vmatpush2.msra.mxu0 0.0
        %1296 = vmatprep.subr.mxu0 0.0
        %1297 = vmatpush2.msra.mxu0 0.0
        %1298 = vmatprep.subr.mxu0 0.0
        %1299 = vmatpush2.msra.mxu0 0.0
        %1300 = vmatprep.subr.mxu0 0.0
        %1301 = vmatpush2.msra.mxu0 0.0
        %1302 = vmatprep.subr.mxu0 0.0
        %1303 = vmatpush2.msra.mxu0 0.0
        %1304 = vmatprep.subr.mxu0 0.0
        %1305 = vmatpush2.msra.mxu0 0.0
        %1306 = vmatprep.subr.mxu0 0.0
        %1307 = vmatpush2.msra.mxu0 0.0
        %1308 = vmatprep.subr.mxu0 0.0
        %1309 = vmatpush2.msra.mxu0 0.0
        %1310 = vmatprep.subr.mxu0 0.0
        %1311 = vmatpush2.msra.mxu0 0.0
        %1312 = vmatprep.subr.mxu0 0.0
        %1313 = vmatpush2.msra.mxu0 0.0
        %1314 = vmatprep.subr.mxu0 0.0
        %1315 = vmatpush2.msra.mxu0 0.0
        %1316 = vmatprep.subr.mxu0 0.0
        %1317 = vmatpush2.msra.mxu0 0.0
        %1318 = vmatprep.subr.mxu0 0.0
        %1319 = vmatpush2.msra.mxu0 0.0
        %1320 = vmatprep.subr.mxu0 0.0
        %1321 = vmatpush2.msra.mxu0 0.0
        %1322 = vmatprep.mubr.f32.mxu0 0.0
        %1323 = vmatmul.mubr.f32.gmra.mxu0 %v1256
        %v1324 = vpop.f32.mrf.mxu0
        %v1325 = vadd.f32 0.0, %v1324
        %v1326 = vpop.f32.mrf.mxu0
        %1327 = vdwg.mxu0
        %1329 = vrot.lane.b32.xlu0 %v1325, 24
        %v1330 = vpop.permute.xlu0 %1329
        %vm1332 = vcmask 261312
        %1333 = vst.msk [vmem:[#allocation5] sm:$0xff] %vm1332, %v1330
        %v1334 = vld [vmem:[#allocation5] sm:$0xff]
        %v1335 = vld [vmem:[%s4] sm:$0xff]
        %v1336 = vld [vmem:[%s4 + $0x8] sm:$0xff]
        %v1337 = vld [vmem:[%s4 + $0x10] sm:$0xff]
        %v1338 = vld [vmem:[%s4 + $0x18] sm:$0xff]
        %v1339 = vld [vmem:[%s5] sm:$0x1]
        %v1341 = vlaneseq
        %v1342 = vshrl.u32 %v1341, 7
        %v1343 = vsub.s32 0, %v1342
        %v1344 = vrot.slane %v1339, %v1343
        %vm1346 = vcmask 261120
        %v1348 = vsel %vm1346, %v1334, 0
        %1350 = vmatprep.subr.mxu0 0.0
        %1351 = vmatpush1.msra.mxu0 0.0
        %1352 = vmatprep.subr.mxu0 0.0
        %1353 = vmatpush1.msra.mxu0 0.0
        %1354 = vmatprep.subr.mxu0 0.0
        %1355 = vmatpush1.msra.mxu0 0.0
        %1356 = vmatprep.subr.mxu0 0.0
        %1357 = vmatpush1.msra.mxu0 0.0
        %1358 = vmatprep.subr.mxu0 0.0
        %1359 = vmatpush1.msra.mxu0 0.0
        %1360 = vmatprep.subr.mxu0 0.0
        %1361 = vmatpush1.msra.mxu0 0.0
        %1362 = vmatprep.subr.mxu0 0.0
        %1363 = vmatpush1.msra.mxu0 0.0
        %1364 = vmatprep.subr.mxu0 0.0
        %1365 = vmatpush1.msra.mxu0 0.0
        %1366 = vmatprep.subr.mxu0 0.0
        %1367 = vmatpush1.msra.mxu0 0.0
        %1368 = vmatprep.subr.mxu0 0.0
        %1369 = vmatpush1.msra.mxu0 0.0
        %1370 = vmatprep.subr.mxu0 0.0
        %1371 = vmatpush1.msra.mxu0 0.0
        %1372 = vmatprep.subr.mxu0 0.0
        %1373 = vmatpush1.msra.mxu0 0.0
        %1374 = vmatprep.subr.mxu0 0.0
        %1375 = vmatpush1.msra.mxu0 %v1338
        %1376 = vmatprep.subr.mxu0 0.0
        %1377 = vmatpush1.msra.mxu0 %v1337
        %1378 = vmatprep.subr.mxu0 0.0
        %1379 = vmatpush1.msra.mxu0 %v1336
        %1380 = vmatprep.subr.mxu0 0.0
        %1381 = vmatpush1.msra.mxu0 %v1335
        %1382 = vmatprep.subr.mxu0 0.0
        %1383 = vmatpush2.msra.mxu0 0.0
        %1384 = vmatprep.subr.mxu0 0.0
        %1385 = vmatpush2.msra.mxu0 0.0
        %1386 = vmatprep.subr.mxu0 0.0
        %1387 = vmatpush2.msra.mxu0 0.0
        %1388 = vmatprep.subr.mxu0 0.0
        %1389 = vmatpush2.msra.mxu0 0.0
        %1390 = vmatprep.subr.mxu0 0.0
        %1391 = vmatpush2.msra.mxu0 0.0
        %1392 = vmatprep.subr.mxu0 0.0
        %1393 = vmatpush2.msra.mxu0 0.0
        %1394 = vmatprep.subr.mxu0 0.0
        %1395 = vmatpush2.msra.mxu0 0.0
        %1396 = vmatprep.subr.mxu0 0.0
        %1397 = vmatpush2.msra.mxu0 0.0
        %1398 = vmatprep.subr.mxu0 0.0
        %1399 = vmatpush2.msra.mxu0 0.0
        %1400 = vmatprep.subr.mxu0 0.0
        %1401 = vmatpush2.msra.mxu0 0.0
        %1402 = vmatprep.subr.mxu0 0.0
        %1403 = vmatpush2.msra.mxu0 0.0
        %1404 = vmatprep.subr.mxu0 0.0
        %1405 = vmatpush2.msra.mxu0 0.0
        %1406 = vmatprep.subr.mxu0 0.0
        %1407 = vmatpush2.msra.mxu0 0.0
        %1408 = vmatprep.subr.mxu0 0.0
        %1409 = vmatpush2.msra.mxu0 0.0
        %1410 = vmatprep.subr.mxu0 0.0
        %1411 = vmatpush2.msra.mxu0 0.0
        %1412 = vmatprep.subr.mxu0 0.0
        %1413 = vmatpush2.msra.mxu0 0.0
        %1414 = vmatprep.mubr.f32.mxu0 0.0
        %1415 = vmatmul.mubr.f32.gmra.mxu0 %v1348
        %v1416 = vpop.f32.mrf.mxu0
        %v1417 = vadd.f32 %v1344, %v1416
        %v1418 = vpop.f32.mrf.mxu0
        %1419 = vdwg.mxu0
        %v1420 = vadd.f32 %v639, %v1417
        %v1421 = vld [vmem:[%s6] sm:$0x1]
        %v1422 = vld [vmem:[%s7] sm:$0x1]
        %v1423 = vsel %vm1346, %v1420, 0.0
        %1424 = vadd.xlane.f32.xlu0 %v1423
        %v1425 = vpop.xlane.xlu0 %1424
        %v1426 = vrcp.pop 32.0
        %v1427 = vmul.f32 %v1425, %v1426
        %v1428 = vsub.f32 %v1420, %v1427
        %v1429 = vmul.f32 %v1428, %v1428
        %v1430 = vsel %vm1346, %v1429, 0.0
        %1431 = vadd.xlane.f32.xlu0 %v1430
        %v1432 = vpop.xlane.xlu0 %1431
        %v1433 = vmul.f32 %v1432, %v1426
        %v1434 = vadd.f32 %v1433, 1e-05
        %v1435 = vrsqrt.pop %v1434
        %v1436 = vmul.f32 %v1428, %v1435
        %v1438 = vlaneseq
        %v1439 = vshrl.u32 %v1438, 7
        %v1440 = vsub.s32 0, %v1439
        %v1441 = vrot.slane %v1421, %v1440
        %v1443 = vmul.f32 %v1436, %v1441
        %v1445 = vlaneseq
        %v1446 = vshrl.u32 %v1445, 7
        %v1447 = vsub.s32 0, %v1446
        %v1448 = vrot.slane %v1422, %v1447
        %v1450 = vadd.f32 %v1443, %v1448
        %v1451 = vld [vmem:[%s8] sm:$0xff]
        %v1452 = vld [vmem:[%s8 + $0x8] sm:$0xff]
        %v1453 = vld [vmem:[%s8 + $0x10] sm:$0xff]
        %v1454 = vld [vmem:[%s8 + $0x18] sm:$0xff]
        %v1455 = vld [vmem:[%s9] sm:$0x1]
        %v1457 = vlaneseq
        %v1458 = vshrl.u32 %v1457, 7
        %v1459 = vsub.s32 0, %v1458
        %v1460 = vrot.slane %v1455, %v1459
        %v1463 = vsel %vm1346, %v1450, 0
        %1465 = vmatprep.subr.mxu0 0.0
        %1466 = vmatpush1.msra.mxu0 0.0
        %1467 = vmatprep.subr.mxu0 0.0
        %1468 = vmatpush1.msra.mxu0 0.0
        %1469 = vmatprep.subr.mxu0 0.0
        %1470 = vmatpush1.msra.mxu0 0.0
        %1471 = vmatprep.subr.mxu0 0.0
        %1472 = vmatpush1.msra.mxu0 0.0
        %1473 = vmatprep.subr.mxu0 0.0
        %1474 = vmatpush1.msra.mxu0 0.0
        %1475 = vmatprep.subr.mxu0 0.0
        %1476 = vmatpush1.msra.mxu0 0.0
        %1477 = vmatprep.subr.mxu0 0.0
        %1478 = vmatpush1.msra.mxu0 0.0
        %1479 = vmatprep.subr.mxu0 0.0
        %1480 = vmatpush1.msra.mxu0 0.0
        %1481 = vmatprep.subr.mxu0 0.0
        %1482 = vmatpush1.msra.mxu0 0.0
        %1483 = vmatprep.subr.mxu0 0.0
        %1484 = vmatpush1.msra.mxu0 0.0
        %1485 = vmatprep.subr.mxu0 0.0
        %1486 = vmatpush1.msra.mxu0 0.0
        %1487 = vmatprep.subr.mxu0 0.0
        %1488 = vmatpush1.msra.mxu0 0.0
        %1489 = vmatprep.subr.mxu0 0.0
        %1490 = vmatpush1.msra.mxu0 %v1454
        %1491 = vmatprep.subr.mxu0 0.0
        %1492 = vmatpush1.msra.mxu0 %v1453
        %1493 = vmatprep.subr.mxu0 0.0
        %1494 = vmatpush1.msra.mxu0 %v1452
        %1495 = vmatprep.subr.mxu0 0.0
        %1496 = vmatpush1.msra.mxu0 %v1451
        %1497 = vmatprep.subr.mxu0 0.0
        %1498 = vmatpush2.msra.mxu0 0.0
        %1499 = vmatprep.subr.mxu0 0.0
        %1500 = vmatpush2.msra.mxu0 0.0
        %1501 = vmatprep.subr.mxu0 0.0
        %1502 = vmatpush2.msra.mxu0 0.0
        %1503 = vmatprep.subr.mxu0 0.0
        %1504 = vmatpush2.msra.mxu0 0.0
        %1505 = vmatprep.subr.mxu0 0.0
        %1506 = vmatpush2.msra.mxu0 0.0
        %1507 = vmatprep.subr.mxu0 0.0
        %1508 = vmatpush2.msra.mxu0 0.0
        %1509 = vmatprep.subr.mxu0 0.0
        %1510 = vmatpush2.msra.mxu0 0.0
        %1511 = vmatprep.subr.mxu0 0.0
        %1512 = vmatpush2.msra.mxu0 0.0
        %1513 = vmatprep.subr.mxu0 0.0
        %1514 = vmatpush2.msra.mxu0 0.0
        %1515 = vmatprep.subr.mxu0 0.0
        %1516 = vmatpush2.msra.mxu0 0.0
        %1517 = vmatprep.subr.mxu0 0.0
        %1518 = vmatpush2.msra.mxu0 0.0
        %1519 = vmatprep.subr.mxu0 0.0
        %1520 = vmatpush2.msra.mxu0 0.0
        %1521 = vmatprep.subr.mxu0 0.0
        %1522 = vmatpush2.msra.mxu0 0.0
        %1523 = vmatprep.subr.mxu0 0.0
        %1524 = vmatpush2.msra.mxu0 0.0
        %1525 = vmatprep.subr.mxu0 0.0
        %1526 = vmatpush2.msra.mxu0 0.0
        %1527 = vmatprep.subr.mxu0 0.0
        %1528 = vmatpush2.msra.mxu0 0.0
        %1529 = vmatprep.mubr.f32.mxu0 0.0
        %1530 = vmatmul.mubr.f32.gmra.mxu0 %v1463
        %v1531 = vpop.f32.mrf.mxu0
        %v1532 = vadd.f32 %v1460, %v1531
        %v1533 = vpop.f32.mrf.mxu0
        %1534 = vdwg.mxu0
        %v1535 = vmax.f32 %v1532, 0.0
        %v1536 = vld [vmem:[%s10] sm:$0xff]
        %v1537 = vld [vmem:[%s10 + $0x8] sm:$0xff]
        %v1538 = vld [vmem:[%s10 + $0x10] sm:$0xff]
        %v1539 = vld [vmem:[%s10 + $0x18] sm:$0xff]
        %v1540 = vld [vmem:[%s10 + $0x20] sm:$0xff]
        %v1541 = vld [vmem:[%s10 + $0x28] sm:$0xff]
        %v1542 = vld [vmem:[%s10 + $0x30] sm:$0xff]
        %v1543 = vld [vmem:[%s10 + $0x38] sm:$0xff]
        %v1544 = vld [vmem:[%s11] sm:$0x1]
        %v1546 = vlaneseq
        %v1547 = vshrl.u32 %v1546, 7
        %v1548 = vsub.s32 0, %v1547
        %v1549 = vrot.slane %v1544, %v1548
        %vm1551 = vcmask 523264
        %v1553 = vsel %vm1551, %v1535, 0
        %1555 = vmatprep.subr.mxu0 0.0
        %1556 = vmatpush1.msra.mxu0 0.0
        %1557 = vmatprep.subr.mxu0 0.0
        %1558 = vmatpush1.msra.mxu0 0.0
        %1559 = vmatprep.subr.mxu0 0.0
        %1560 = vmatpush1.msra.mxu0 0.0
        %1561 = vmatprep.subr.mxu0 0.0
        %1562 = vmatpush1.msra.mxu0 0.0
        %1563 = vmatprep.subr.mxu0 0.0
        %1564 = vmatpush1.msra.mxu0 0.0
        %1565 = vmatprep.subr.mxu0 0.0
        %1566 = vmatpush1.msra.mxu0 0.0
        %1567 = vmatprep.subr.mxu0 0.0
        %1568 = vmatpush1.msra.mxu0 0.0
        %1569 = vmatprep.subr.mxu0 0.0
        %1570 = vmatpush1.msra.mxu0 0.0
        %1571 = vmatprep.subr.mxu0 0.0
        %1572 = vmatpush1.msra.mxu0 %v1543
        %1573 = vmatprep.subr.mxu0 0.0
        %1574 = vmatpush1.msra.mxu0 %v1542
        %1575 = vmatprep.subr.mxu0 0.0
        %1576 = vmatpush1.msra.mxu0 %v1541
        %1577 = vmatprep.subr.mxu0 0.0
        %1578 = vmatpush1.msra.mxu0 %v1540
        %1579 = vmatprep.subr.mxu0 0.0
        %1580 = vmatpush1.msra.mxu0 %v1539
        %1581 = vmatprep.subr.mxu0 0.0
        %1582 = vmatpush1.msra.mxu0 %v1538
        %1583 = vmatprep.subr.mxu0 0.0
        %1584 = vmatpush1.msra.mxu0 %v1537
        %1585 = vmatprep.subr.mxu0 0.0
        %1586 = vmatpush1.msra.mxu0 %v1536
        %1587 = vmatprep.subr.mxu0 0.0
        %1588 = vmatpush2.msra.mxu0 0.0
        %1589 = vmatprep.subr.mxu0 0.0
        %1590 = vmatpush2.msra.mxu0 0.0
        %1591 = vmatprep.subr.mxu0 0.0
        %1592 = vmatpush2.msra.mxu0 0.0
        %1593 = vmatprep.subr.mxu0 0.0
        %1594 = vmatpush2.msra.mxu0 0.0
        %1595 = vmatprep.subr.mxu0 0.0
        %1596 = vmatpush2.msra.mxu0 0.0
        %1597 = vmatprep.subr.mxu0 0.0
        %1598 = vmatpush2.msra.mxu0 0.0
        %1599 = vmatprep.subr.mxu0 0.0
        %1600 = vmatpush2.msra.mxu0 0.0
        %1601 = vmatprep.subr.mxu0 0.0
        %1602 = vmatpush2.msra.mxu0 0.0
        %1603 = vmatprep.subr.mxu0 0.0
        %1604 = vmatpush2.msra.mxu0 0.0
        %1605 = vmatprep.subr.mxu0 0.0
        %1606 = vmatpush2.msra.mxu0 0.0
        %1607 = vmatprep.subr.mxu0 0.0
        %1608 = vmatpush2.msra.mxu0 0.0
        %1609 = vmatprep.subr.mxu0 0.0
        %1610 = vmatpush2.msra.mxu0 0.0
        %1611 = vmatprep.subr.mxu0 0.0
        %1612 = vmatpush2.msra.mxu0 0.0
        %1613 = vmatprep.subr.mxu0 0.0
        %1614 = vmatpush2.msra.mxu0 0.0
        %1615 = vmatprep.subr.mxu0 0.0
        %1616 = vmatpush2.msra.mxu0 0.0
        %1617 = vmatprep.subr.mxu0 0.0
        %1618 = vmatpush2.msra.mxu0 0.0
        %1619 = vmatprep.mubr.f32.mxu0 0.0
        %1620 = vmatmul.mubr.f32.gmra.mxu0 %v1553
        %v1621 = vpop.f32.mrf.mxu0
        %v1622 = vadd.f32 %v1549, %v1621
        %v1623 = vpop.f32.mrf.mxu0
        %1624 = vdwg.mxu0
        %v1625 = vadd.f32 %v1450, %v1622
        %v1626 = vld [vmem:[%s12] sm:$0x1]
        %v1627 = vld [vmem:[%s13] sm:$0x1]
        %v1628 = vsel %vm1346, %v1625, 0.0
        %1629 = vadd.xlane.f32.xlu0 %v1628
        %v1630 = vpop.xlane.xlu0 %1629
        %v1631 = vmul.f32 %v1630, %v1426
        %v1632 = vsub.f32 %v1625, %v1631
        %v1633 = vmul.f32 %v1632, %v1632
        %v1634 = vsel %vm1346, %v1633, 0.0
        %1635 = vadd.xlane.f32.xlu0 %v1634
        %v1636 = vpop.xlane.xlu0 %1635
        %v1637 = vmul.f32 %v1636, %v1426
        %v1638 = vadd.f32 %v1637, 1e-05
        %v1639 = vrsqrt.pop %v1638
        %v1640 = vmul.f32 %v1632, %v1639
        %v1642 = vlaneseq
        %v1643 = vshrl.u32 %v1642, 7
        %v1644 = vsub.s32 0, %v1643
        %v1645 = vrot.slane %v1626, %v1644
        %v1647 = vmul.f32 %v1640, %v1645
        %v1649 = vlaneseq
        %v1650 = vshrl.u32 %v1649, 7
        %v1651 = vsub.s32 0, %v1650
        %v1652 = vrot.slane %v1627, %v1651
        %v1654 = vadd.f32 %v1647, %v1652
        %1655 = vst.msk [vmem:[%s536] sm:$0xff] %vm1346, %v1654
        %s1656 = sand.u32 %s362, 1
        %s1657 = scalar_lea.sflag [#allocation8], %s1656
        %s1658 = sand.u32 %s362, 1
        %s1659 = smul.addr %s1658, 8
        %s1660 = scalar_lea.vmem [#allocation11], %s1659
        // Predicated region
        $region89: #{tpu_custom_call.1} parent=75 // pred_check
          %p1661 = pneg %p372
        $region90: #{tpu_custom_call.1} parent=75 // pred_check_branch
          %1663 = sbr.rel (%p1661) target = $region92
        $region91: #{tpu_custom_call.1} parent=75 // pred_region
          %s1665 = ssub.s32 128, 128
          %1666 = vsyncadd %s1657, %s1665
          %s1667 = sadd.s32 %s39, %s38
          %s1668 = smul.addr %s1667, 128
          %s1669 = scalar_lea.hbm %s14, %s1668
          %s1671 = sshll.u32 %s1660, 4
          %s1672 = int_to_ptr.vmem [resolvable:$true] %s1671
          %1674 = dma.vmem_to_hbm [thread:$0]  %s1672, 128, %s1669, %s1657
        $region92: #{tpu_custom_call.1} parent=75 // pred_fallthru
          _
      $region76: #{tpu_custom_call.1} parent=5 // pred_fallthru
        _
      %p1675 = scmp.le.s32.totalorder 2, %s29
      // Predicated region
      $region93: #{tpu_custom_call.1} parent=5 // pred_check
        %p1676 = pneg %p1675
      $region94: #{tpu_custom_call.1} parent=5 // pred_check_branch
        %1678 = sbr.rel (%p1676) target = $region96
      $region95: #{tpu_custom_call.1} parent=5 // pred_region
        %s1679 = ssub.s32 %s29, 2
        // Predicated region
        $region97: #{tpu_custom_call.1} parent=95 // pred_check
          %p1680 = pneg %p378
        $region98: #{tpu_custom_call.1} parent=95 // pred_check_branch
          %1682 = sbr.rel (%p1680) target = $region100
        $region99: #{tpu_custom_call.1} parent=95 // pred_region
          %s1683 = sand.u32 %s363, 1
          %s1684 = scalar_lea.sflag [#allocation8], %s1683
          %s1685 = sand.u32 %s363, 1
          %s1686 = smul.addr %s1685, 8
          %s1687 = scalar_lea.vmem [#allocation11], %s1686
          %1688 = dma.done %s1684, 128
        $region100: #{tpu_custom_call.1} parent=95 // pred_fallthru
          _
      $region96: #{tpu_custom_call.1} parent=5 // pred_fallthru
        _
    $region6: #{tpu_custom_call.1} parent=1 // loop_footer
      %s33 = sadd.s32 1, %s29
    $region7: #{tpu_custom_call.1} parent=1 // loop_footer_branch
      %28 = sbr.rel target = $region3
    $region8: #{tpu_custom_call.1} parent=1 // loop_exit
      _
    %1689 = vsyncpa [#allocation7], 1
    %s1690 = scalar_lea.sflag [#allocation7], 1
    %1691 = vsyncpa %s1690, 1
    %1692 = vsyncpa [#allocation10], 1
    %s1693 = scalar_lea.sflag [#allocation10], 1
    %1694 = vsyncpa %s1693, 1
    %1695 = vsyncpa [#allocation8], 1
    %s1696 = scalar_lea.sflag [#allocation8], 1
    %1697 = vsyncpa %s1696, 1

</llo_original>
